<compile_context>
chip_gen: v5e
topology: v5e:2x2
jax: 0.10.0
libtpu: 0.0.40
codegen_flags: <defaults>
</compile_context>

<pallas_src>
import jax
import jax.numpy as jnp
from jax.experimental import pallas as pl
from jax.experimental.pallas import tpu as pltpu

# ----------------------------- small synthetic "ALBERT" config -----------------------------
VOCAB      = 100
MAX_POS    = 64
TYPE_VOCAB = 2
EMB        = 16          # ALBERT embedding_size
HID        = 32          # hidden_size
NHEAD      = 4
HEAD_DIM   = HID // NHEAD
FFN        = 64          # intermediate_size
NLAYERS    = 2           # ALBERT shares ONE layer's weights across all layers
NCLASSES   = 3
NCLS_PAD   = 128         # lane-dense padded classifier width (real logits in [:NCLASSES])
SEQ        = 8
BATCH      = 2
LN_EPS     = 1e-12


# ----------------------------------- kernel helpers ----------------------------------------
def _layernorm(x, gamma, beta):
    mu = jnp.mean(x, axis=-1, keepdims=True)
    var = jnp.mean((x - mu) ** 2, axis=-1, keepdims=True)
    return (x - mu) * jax.lax.rsqrt(var + LN_EPS) * gamma + beta


def _mm(a, b):
    # bf16 MXU matmul, f32 accumulation.
    return jnp.dot(a.astype(jnp.bfloat16), b.astype(jnp.bfloat16),
                   preferred_element_type=jnp.float32)


def _mm_nt(a, b):
    # a @ b.T (contract last dim of both), bf16 operands, f32 accumulation.
    return jax.lax.dot_general(a.astype(jnp.bfloat16), b.astype(jnp.bfloat16),
                               (((1,), (1,)), ((), ())),
                               preferred_element_type=jnp.float32)


# ----------------------------------- fused Pallas kernel ------------------------------------
def _fused_forward_kernel(e_ref, bias_ref,
                          eg_ref, eb_ref, pw_ref, pb_ref,
                          wqkv_ref, bqkv_ref,
                          wo_ref, bo_ref, g1_ref, be1_ref,
                          w1_ref, b1_ref, w2_ref, b2_ref, g2_ref, be2_ref,
                          wp_ref, bp_ref, wc_ref, bc_ref,
                          out_ref,
                          h_scr, ctx_scr):
    # ---- ALBERT embeddings: LayerNorm over EMB, then projection EMB -> HID ----
    e = _layernorm(e_ref[...], eg_ref[...], eb_ref[...])            # (B*S, EMB) f32
    h_scr[...] = _mm(e, pw_ref[...]) + pb_ref[...]                  # (B*S, HID)

    bias = bias_ref[...]                                            # (B*S, B*S) additive
    scale = 1.0 / (HEAD_DIM ** 0.5)

    # ALBERT cross-layer parameter sharing: same weight refs every iteration.
    for _ in range(NLAYERS):
        x = h_scr[...]                                              # (B*S, HID)
        qkv = _mm(x, wqkv_ref[...]) + bqkv_ref[...]                 # (B*S, 3*HID)
        q = qkv[:, :HID]
        k = qkv[:, HID:2 * HID]
        v = qkv[:, 2 * HID:]
        for hd in range(NHEAD):                                     # static, 4 iterations
            sl = slice(hd * HEAD_DIM, (hd + 1) * HEAD_DIM)
            # whole-batch scores; block-diagonal bias kills cross-batch terms exactly
            s = _mm_nt(q[:, sl], k[:, sl]) * scale + bias           # (B*S, B*S)
            s = s - jnp.max(s, axis=-1, keepdims=True)
            p = jnp.exp(s)
            p = p * pl.reciprocal(jnp.sum(p, axis=-1, keepdims=True), approx=True)
            ctx_scr[:, sl] = _mm(p, v[:, sl])                       # head ctx -> scratch slice
        attn = _mm(ctx_scr[...], wo_ref[...]) + bo_ref[...]
        h1 = _layernorm(x + attn, g1_ref[...], be1_ref[...])
        f = _mm(h1, w1_ref[...]) + b1_ref[...]
        f = jax.nn.gelu(f, approximate=True)                        # ALBERT "gelu_new"
        f = _mm(f, w2_ref[...]) + b2_ref[...]
        h_scr[...] = _layernorm(h1 + f, g2_ref[...], be2_ref[...])

    # ---- pooler (tanh) + dropout(identity in eval) + classifier (lane-padded) ----
    # Pooler/classifier run over all B*S rows (negligible extra work at this size);
    # the wrapper selects the [CLS] rows and un-pads the class dimension.
    pooled = jnp.tanh(_mm(h_scr[...], wp_ref[...]) + bp_ref[...])
    out_ref[...] = _mm(pooled, wc_ref[...]) + bc_ref[...]           # (B*S, NCLS_PAD)


# ----------------------------------- Pallas wrapper -----------------------------------------
def _full(shape):
    return pl.BlockSpec(shape, lambda i: (0,) * len(shape))


def fused_forward_pallas(e_flat, bias_full, p):
    BS = e_flat.shape[0]
    bf16 = lambda w: w.astype(jnp.bfloat16)

    # fuse Q/K/V projections into one (HID, 3*HID) matmul
    wqkv = jnp.concatenate([p["wq"], p["wk"], p["wv"]], axis=1)
    bqkv = jnp.concatenate([p["bq"], p["bk"], p["bv"]], axis=1)
    # lane-pad the classifier so the output store is 128-lane dense
    cls_w_pad = jnp.zeros((HID, NCLS_PAD), jnp.float32).at[:, :NCLASSES].set(p["cls_w"])
    cls_b_pad = jnp.zeros((1, NCLS_PAD), jnp.float32).at[:, :NCLASSES].set(p["cls_b"])

    args = (
        e_flat, bias_full,
        p["emb_ln_g"], p["emb_ln_b"], bf16(p["emb_proj_w"]), p["emb_proj_b"],
        bf16(wqkv), bqkv,
        bf16(p["wo"]), p["bo"], p["ln1_g"], p["ln1_b"],
        bf16(p["w1"]), p["b1"], bf16(p["w2"]), p["b2"], p["ln2_g"], p["ln2_b"],
        bf16(p["pool_w"]), p["pool_b"], bf16(cls_w_pad), cls_b_pad,
    )
    return pl.pallas_call(
        _fused_forward_kernel,
        out_shape=jax.ShapeDtypeStruct((BS, NCLS_PAD), jnp.float32),
        grid=(1,),
        in_specs=[_full(a.shape) for a in args],
        out_specs=_full((BS, NCLS_PAD)),
        scratch_shapes=[pltpu.VMEM((BS, HID), jnp.float32),   # resident hidden states
                        pltpu.VMEM((BS, HID), jnp.float32)],  # per-head context assembly
        compiler_params=pltpu.CompilerParams(dimension_semantics=("arbitrary",)),
    )(*args)


# ----------------------------------- parameters & glue --------------------------------------
def init_params(seed=0):
    keys = jax.random.split(jax.random.PRNGKey(seed), 16)
    n = lambda k, shape: (0.02 * jax.random.normal(k, shape)).astype(jnp.float32)
    zeros = lambda shape: jnp.zeros(shape, jnp.float32)
    ones = lambda shape: jnp.ones(shape, jnp.float32)
    return {
        # embeddings (ALBERT: embedding_size EMB, then projection EMB -> HID)
        "word_emb": n(keys[0], (VOCAB, EMB)),
        "pos_emb":  n(keys[1], (MAX_POS, EMB)),
        "type_emb": n(keys[2], (TYPE_VOCAB, EMB)),
        "emb_ln_g": ones((1, EMB)), "emb_ln_b": zeros((1, EMB)),
        "emb_proj_w": n(keys[3], (EMB, HID)), "emb_proj_b": zeros((1, HID)),
        # shared encoder layer
        "wq": n(keys[4], (HID, HID)), "bq": zeros((1, HID)),
        "wk": n(keys[5], (HID, HID)), "bk": zeros((1, HID)),
        "wv": n(keys[6], (HID, HID)), "bv": zeros((1, HID)),
        "wo": n(keys[7], (HID, HID)), "bo": zeros((1, HID)),
        "ln1_g": ones((1, HID)), "ln1_b": zeros((1, HID)),
        "w1": n(keys[8], (HID, FFN)), "b1": zeros((1, FFN)),
        "w2": n(keys[9], (FFN, HID)), "b2": zeros((1, HID)),
        "ln2_g": ones((1, HID)), "ln2_b": zeros((1, HID)),
        # pooler + classifier head (self.out)
        "pool_w": n(keys[10], (HID, HID)), "pool_b": zeros((1, HID)),
        "cls_w":  n(keys[11], (HID, NCLASSES)), "cls_b": zeros((1, NCLASSES)),
    }


def news_subject_classifier_forward(params, input_ids, attention_mask):
    B, S = input_ids.shape
    # ---- plain-JAX glue: embedding table gathers (no clean Pallas gather at this size) ----
    token_type_ids = jnp.zeros_like(input_ids)
    we = jnp.take(params["word_emb"], input_ids, axis=0)            # (B,S,E)
    pe = params["pos_emb"][:S][None, :, :]                          # (1,S,E)
    te = jnp.take(params["type_emb"], token_type_ids, axis=0)       # (B,S,E)
    e = (we + pe + te).reshape(B * S, EMB)

    # Block-diagonal additive attention bias over the flattened (B*S) token axis:
    # in-batch padded keys -> -1e4 (HF convention), cross-batch pairs -> -1e9.
    # Both underflow to exact 0 after the max-subtracted exp, so per-batch attention
    # is reproduced exactly with the whole batch fused into one score matmul.
    m = attention_mask.astype(jnp.float32).reshape(B * S)
    batch_of = jnp.arange(B * S, dtype=jnp.int32) // S
    same_batch = batch_of[:, None] == batch_of[None, :]
    bias_full = jnp.where(same_batch, (1.0 - m)[None, :] * -1e4, -1e9).astype(jnp.float32)

    out = fused_forward_pallas(e, bias_full, params)                # (B*S, NCLS_PAD)
    logits = out.reshape(B, S, NCLS_PAD)[:, 0, :NCLASSES]           # [CLS] rows, un-padded
    return logits


# --------------------------------------- main ------------------------------------------------
if __name__ == "__main__":
    params = init_params(0)

    key = jax.random.PRNGKey(0)
    input_ids = jax.random.randint(key, (BATCH, SEQ), 0, VOCAB, dtype=jnp.int32)
    attention_mask = jnp.array([[1, 1, 1, 1, 1, 1, 1, 1],
                                [1, 1, 1, 1, 1, 0, 0, 0]], dtype=jnp.int32)

    fwd = jax.jit(news_subject_classifier_forward)
    logits = fwd(params, input_ids, attention_mask)
    jax.block_until_ready(logits)
    assert logits.shape == (BATCH, NCLASSES) and logits.dtype == jnp.float32
    print("KERNEL_OK")
</pallas_src>

<mosaic_0001>
module attributes {stable_mosaic.version = 11 : i64} {
  func.func @_fused_forward_kernel(%arg0: i32, %arg1: memref<16x16xf32, #tpu.memory_space<vmem>>, %arg2: memref<16x16xf32, #tpu.memory_space<vmem>>, %arg3: memref<1x16xf32, #tpu.memory_space<vmem>>, %arg4: memref<1x16xf32, #tpu.memory_space<vmem>>, %arg5: memref<16x32xbf16, #tpu.memory_space<vmem>>, %arg6: memref<1x32xf32, #tpu.memory_space<vmem>>, %arg7: memref<32x96xbf16, #tpu.memory_space<vmem>>, %arg8: memref<1x96xf32, #tpu.memory_space<vmem>>, %arg9: memref<32x32xbf16, #tpu.memory_space<vmem>>, %arg10: memref<1x32xf32, #tpu.memory_space<vmem>>, %arg11: memref<1x32xf32, #tpu.memory_space<vmem>>, %arg12: memref<1x32xf32, #tpu.memory_space<vmem>>, %arg13: memref<32x64xbf16, #tpu.memory_space<vmem>>, %arg14: memref<1x64xf32, #tpu.memory_space<vmem>>, %arg15: memref<64x32xbf16, #tpu.memory_space<vmem>>, %arg16: memref<1x32xf32, #tpu.memory_space<vmem>>, %arg17: memref<1x32xf32, #tpu.memory_space<vmem>>, %arg18: memref<1x32xf32, #tpu.memory_space<vmem>>, %arg19: memref<32x32xbf16, #tpu.memory_space<vmem>>, %arg20: memref<1x32xf32, #tpu.memory_space<vmem>>, %arg21: memref<32x128xbf16, #tpu.memory_space<vmem>>, %arg22: memref<1x128xf32, #tpu.memory_space<vmem>>, %arg23: memref<16x128xf32, #tpu.memory_space<vmem>>, %arg24: memref<16x32xf32, #tpu.memory_space<vmem>>, %arg25: memref<16x32xf32, #tpu.memory_space<vmem>>) attributes {dimension_semantics = [#tpu.dimension_semantics<arbitrary>], iteration_bounds = array<i64: 1>, scalar_prefetch = 0 : i64, scratch_operands = 2 : i64, tpu.core_type = #tpu.core_type<tc>, window_params = [{pipeline_mode = #tpu.pipeline_mode<synchronous>, transform_indices = @transform_0, window_bounds = array<i64: 16, 16>}, {pipeline_mode = #tpu.pipeline_mode<synchronous>, transform_indices = @transform_1, window_bounds = array<i64: 16, 16>}, {pipeline_mode = #tpu.pipeline_mode<synchronous>, transform_indices = @transform_2, window_bounds = array<i64: 1, 16>}, {pipeline_mode = #tpu.pipeline_mode<synchronous>, transform_indices = @transform_3, window_bounds = array<i64: 1, 16>}, {pipeline_mode = #tpu.pipeline_mode<synchronous>, transform_indices = @transform_4, window_bounds = array<i64: 16, 32>}, {pipeline_mode = #tpu.pipeline_mode<synchronous>, transform_indices = @transform_5, window_bounds = array<i64: 1, 32>}, {pipeline_mode = #tpu.pipeline_mode<synchronous>, transform_indices = @transform_6, window_bounds = array<i64: 32, 96>}, {pipeline_mode = #tpu.pipeline_mode<synchronous>, transform_indices = @transform_7, window_bounds = array<i64: 1, 96>}, {pipeline_mode = #tpu.pipeline_mode<synchronous>, transform_indices = @transform_8, window_bounds = array<i64: 32, 32>}, {pipeline_mode = #tpu.pipeline_mode<synchronous>, transform_indices = @transform_9, window_bounds = array<i64: 1, 32>}, {pipeline_mode = #tpu.pipeline_mode<synchronous>, transform_indices = @transform_10, window_bounds = array<i64: 1, 32>}, {pipeline_mode = #tpu.pipeline_mode<synchronous>, transform_indices = @transform_11, window_bounds = array<i64: 1, 32>}, {pipeline_mode = #tpu.pipeline_mode<synchronous>, transform_indices = @transform_12, window_bounds = array<i64: 32, 64>}, {pipeline_mode = #tpu.pipeline_mode<synchronous>, transform_indices = @transform_13, window_bounds = array<i64: 1, 64>}, {pipeline_mode = #tpu.pipeline_mode<synchronous>, transform_indices = @transform_14, window_bounds = array<i64: 64, 32>}, {pipeline_mode = #tpu.pipeline_mode<synchronous>, transform_indices = @transform_15, window_bounds = array<i64: 1, 32>}, {pipeline_mode = #tpu.pipeline_mode<synchronous>, transform_indices = @transform_16, window_bounds = array<i64: 1, 32>}, {pipeline_mode = #tpu.pipeline_mode<synchronous>, transform_indices = @transform_17, window_bounds = array<i64: 1, 32>}, {pipeline_mode = #tpu.pipeline_mode<synchronous>, transform_indices = @transform_18, window_bounds = array<i64: 32, 32>}, {pipeline_mode = #tpu.pipeline_mode<synchronous>, transform_indices = @transform_19, window_bounds = array<i64: 1, 32>}, {pipeline_mode = #tpu.pipeline_mode<synchronous>, transform_indices = @transform_20, window_bounds = array<i64: 32, 128>}, {pipeline_mode = #tpu.pipeline_mode<synchronous>, transform_indices = @transform_21, window_bounds = array<i64: 1, 128>}, {pipeline_mode = #tpu.pipeline_mode<synchronous>, transform_indices = @transform_22, window_bounds = array<i64: 16, 128>}]} {
    %c0 = arith.constant 0 : index
    %c0_0 = arith.constant 0 : index
    %0 = vector.load %arg1[%c0, %c0_0] : memref<16x16xf32, #tpu.memory_space<vmem>>, vector<16x16xf32>
    %c0_1 = arith.constant 0 : index
    %c0_2 = arith.constant 0 : index
    %1 = vector.load %arg3[%c0_1, %c0_2] : memref<1x16xf32, #tpu.memory_space<vmem>>, vector<1x16xf32>
    %c0_3 = arith.constant 0 : index
    %c0_4 = arith.constant 0 : index
    %2 = vector.load %arg4[%c0_3, %c0_4] : memref<1x16xf32, #tpu.memory_space<vmem>>, vector<1x16xf32>
    %cst = arith.constant dense<0.000000e+00> : vector<16xf32>
    %3 = vector.multi_reduction <add>, %0, %cst [1] : vector<16x16xf32> to vector<16xf32>
    %4 = vector.shape_cast %3 : vector<16xf32> to vector<16x1xf32>
    %cst_5 = arith.constant 1.600000e+01 : f32
    %5 = vector.broadcast %cst_5 : f32 to vector<16x1xf32>
    %6 = arith.divf %4, %5 : vector<16x1xf32>
    %7 = vector.broadcast %6 : vector<16x1xf32> to vector<16x16xf32>
    %8 = arith.subf %0, %7 : vector<16x16xf32>
    %9 = arith.mulf %8, %8 : vector<16x16xf32>
    %cst_6 = arith.constant dense<0.000000e+00> : vector<16xf32>
    %10 = vector.multi_reduction <add>, %9, %cst_6 [1] : vector<16x16xf32> to vector<16xf32>
    %11 = vector.shape_cast %10 : vector<16xf32> to vector<16x1xf32>
    %cst_7 = arith.constant 1.600000e+01 : f32
    %12 = vector.broadcast %cst_7 : f32 to vector<16x1xf32>
    %13 = arith.divf %11, %12 : vector<16x1xf32>
    %14 = vector.broadcast %6 : vector<16x1xf32> to vector<16x16xf32>
    %15 = arith.subf %0, %14 : vector<16x16xf32>
    %cst_8 = arith.constant 9.99999996E-13 : f32
    %16 = vector.broadcast %cst_8 : f32 to vector<16x1xf32>
    %17 = arith.addf %13, %16 : vector<16x1xf32>
    %18 = math.rsqrt %17 : vector<16x1xf32>
    %19 = vector.broadcast %18 : vector<16x1xf32> to vector<16x16xf32>
    %20 = arith.mulf %15, %19 : vector<16x16xf32>
    %21 = vector.broadcast %1 : vector<1x16xf32> to vector<16x16xf32>
    %22 = arith.mulf %20, %21 : vector<16x16xf32>
    %23 = vector.broadcast %2 : vector<1x16xf32> to vector<16x16xf32>
    %24 = arith.addf %22, %23 : vector<16x16xf32>
    %c0_9 = arith.constant 0 : index
    %c0_10 = arith.constant 0 : index
    %25 = vector.load %arg5[%c0_9, %c0_10] : memref<16x32xbf16, #tpu.memory_space<vmem>>, vector<16x32xbf16>
    %26 = arith.truncf %24 : vector<16x16xf32> to vector<16x16xbf16>
    %cst_11 = arith.constant dense<0.000000e+00> : vector<16x32xf32>
    %27 = tpu.matmul %26, %25, %cst_11 {dimension_numbers = #tpu.dot_dimension_numbers<[1], [0], [0], [1], [0, 0, 1, 1], [], []>} : vector<16x16xbf16>, vector<16x32xbf16>, vector<16x32xf32> -> vector<16x32xf32>
    %c0_12 = arith.constant 0 : index
    %c0_13 = arith.constant 0 : index
    %28 = vector.load %arg6[%c0_12, %c0_13] : memref<1x32xf32, #tpu.memory_space<vmem>>, vector<1x32xf32>
    %29 = vector.broadcast %28 : vector<1x32xf32> to vector<16x32xf32>
    %30 = arith.addf %27, %29 : vector<16x32xf32>
    %c0_14 = arith.constant 0 : index
    %c0_15 = arith.constant 0 : index
    %31 = vector.load %arg24[%c0_14, %c0_15] : memref<16x32xf32, #tpu.memory_space<vmem>>, vector<16x32xf32>
    tpu.vector_store %arg24[%c0_14, %c0_15], %30 {strides = array<i32>} : memref<16x32xf32, #tpu.memory_space<vmem>>, vector<16x32xf32>,
    %c0_16 = arith.constant 0 : index
    %c0_17 = arith.constant 0 : index
    %32 = vector.load %arg2[%c0_16, %c0_17] : memref<16x16xf32, #tpu.memory_space<vmem>>, vector<16x16xf32>
    %c0_18 = arith.constant 0 : index
    %c0_19 = arith.constant 0 : index
    %33 = vector.load %arg24[%c0_18, %c0_19] : memref<16x32xf32, #tpu.memory_space<vmem>>, vector<16x32xf32>
    %c0_20 = arith.constant 0 : index
    %c0_21 = arith.constant 0 : index
    %34 = vector.load %arg7[%c0_20, %c0_21] : memref<32x96xbf16, #tpu.memory_space<vmem>>, vector<32x96xbf16>
    %35 = arith.truncf %33 : vector<16x32xf32> to vector<16x32xbf16>
    %cst_22 = arith.constant dense<0.000000e+00> : vector<16x96xf32>
    %36 = tpu.matmul %35, %34, %cst_22 {dimension_numbers = #tpu.dot_dimension_numbers<[1], [0], [0], [1], [0, 0, 1, 1], [], []>} : vector<16x32xbf16>, vector<32x96xbf16>, vector<16x96xf32> -> vector<16x96xf32>
    %c0_23 = arith.constant 0 : index
    %c0_24 = arith.constant 0 : index
    %37 = vector.load %arg8[%c0_23, %c0_24] : memref<1x96xf32, #tpu.memory_space<vmem>>, vector<1x96xf32>
    %38 = vector.broadcast %37 : vector<1x96xf32> to vector<16x96xf32>
    %39 = arith.addf %36, %38 : vector<16x96xf32>
    %40 = vector.extract_strided_slice %39 {offsets = [0, 0], sizes = [16, 32], strides = [1, 1]} : vector<16x96xf32> to vector<16x32xf32>
    %41 = vector.extract_strided_slice %39 {offsets = [0, 32], sizes = [16, 32], strides = [1, 1]} : vector<16x96xf32> to vector<16x32xf32>
    %42 = vector.extract_strided_slice %39 {offsets = [0, 64], sizes = [16, 32], strides = [1, 1]} : vector<16x96xf32> to vector<16x32xf32>
    %43 = vector.extract_strided_slice %40 {offsets = [0, 0], sizes = [16, 8], strides = [1, 1]} : vector<16x32xf32> to vector<16x8xf32>
    %44 = vector.extract_strided_slice %41 {offsets = [0, 0], sizes = [16, 8], strides = [1, 1]} : vector<16x32xf32> to vector<16x8xf32>
    %45 = arith.truncf %43 : vector<16x8xf32> to vector<16x8xbf16>
    %46 = arith.truncf %44 : vector<16x8xf32> to vector<16x8xbf16>
    %cst_25 = arith.constant dense<0.000000e+00> : vector<16x16xf32>
    %47 = tpu.matmul %45, %46, %cst_25 {dimension_numbers = #tpu.dot_dimension_numbers<[1], [1], [0], [0], [0, 0, 1, 0], [], []>} : vector<16x8xbf16>, vector<16x8xbf16>, vector<16x16xf32> -> vector<16x16xf32>
    %cst_26 = arith.constant 0.353553385 : f32
    %48 = vector.broadcast %cst_26 : f32 to vector<16x16xf32>
    %49 = arith.mulf %47, %48 : vector<16x16xf32>
    %50 = arith.addf %49, %32 : vector<16x16xf32>
    %cst_27 = arith.constant dense<0xFF800000> : vector<16xf32>
    %51 = vector.multi_reduction <maximumf>, %50, %cst_27 [1] : vector<16x16xf32> to vector<16xf32>
    %52 = vector.shape_cast %51 : vector<16xf32> to vector<16x1xf32>
    %53 = vector.broadcast %52 : vector<16x1xf32> to vector<16x16xf32>
    %54 = arith.subf %50, %53 : vector<16x16xf32>
    %55 = math.exp %54 : vector<16x16xf32>
    %cst_28 = arith.constant dense<0.000000e+00> : vector<16xf32>
    %56 = vector.multi_reduction <add>, %55, %cst_28 [1] : vector<16x16xf32> to vector<16xf32>
    %57 = vector.shape_cast %56 : vector<16xf32> to vector<16x1xf32>
    %58 = tpu.reciprocal %57 {approx = true} : vector<16x1xf32> -> vector<16x1xf32>
    %59 = vector.broadcast %58 : vector<16x1xf32> to vector<16x16xf32>
    %60 = arith.mulf %55, %59 : vector<16x16xf32>
    %61 = vector.extract_strided_slice %42 {offsets = [0, 0], sizes = [16, 8], strides = [1, 1]} : vector<16x32xf32> to vector<16x8xf32>
    %62 = arith.truncf %60 : vector<16x16xf32> to vector<16x16xbf16>
    %63 = arith.truncf %61 : vector<16x8xf32> to vector<16x8xbf16>
    %cst_29 = arith.constant dense<0.000000e+00> : vector<16x8xf32>
    %64 = tpu.matmul %62, %63, %cst_29 {dimension_numbers = #tpu.dot_dimension_numbers<[1], [0], [0], [1], [0, 0, 1, 1], [], []>} : vector<16x16xbf16>, vector<16x8xbf16>, vector<16x8xf32> -> vector<16x8xf32>
    %c0_30 = arith.constant 0 : index
    %c0_31 = arith.constant 0 : index
    %65 = vector.load %arg25[%c0_30, %c0_31] : memref<16x32xf32, #tpu.memory_space<vmem>>, vector<16x8xf32>
    tpu.vector_store %arg25[%c0_30, %c0_31], %64 {strides = array<i32>} : memref<16x32xf32, #tpu.memory_space<vmem>>, vector<16x8xf32>,
    %66 = vector.extract_strided_slice %40 {offsets = [0, 8], sizes = [16, 8], strides = [1, 1]} : vector<16x32xf32> to vector<16x8xf32>
    %67 = vector.extract_strided_slice %41 {offsets = [0, 8], sizes = [16, 8], strides = [1, 1]} : vector<16x32xf32> to vector<16x8xf32>
    %68 = arith.truncf %66 : vector<16x8xf32> to vector<16x8xbf16>
    %69 = arith.truncf %67 : vector<16x8xf32> to vector<16x8xbf16>
    %cst_32 = arith.constant dense<0.000000e+00> : vector<16x16xf32>
    %70 = tpu.matmul %68, %69, %cst_32 {dimension_numbers = #tpu.dot_dimension_numbers<[1], [1], [0], [0], [0, 0, 1, 0], [], []>} : vector<16x8xbf16>, vector<16x8xbf16>, vector<16x16xf32> -> vector<16x16xf32>
    %cst_33 = arith.constant 0.353553385 : f32
    %71 = vector.broadcast %cst_33 : f32 to vector<16x16xf32>
    %72 = arith.mulf %70, %71 : vector<16x16xf32>
    %73 = arith.addf %72, %32 : vector<16x16xf32>
    %cst_34 = arith.constant dense<0xFF800000> : vector<16xf32>
    %74 = vector.multi_reduction <maximumf>, %73, %cst_34 [1] : vector<16x16xf32> to vector<16xf32>
    %75 = vector.shape_cast %74 : vector<16xf32> to vector<16x1xf32>
    %76 = vector.broadcast %75 : vector<16x1xf32> to vector<16x16xf32>
    %77 = arith.subf %73, %76 : vector<16x16xf32>
    %78 = math.exp %77 : vector<16x16xf32>
    %cst_35 = arith.constant dense<0.000000e+00> : vector<16xf32>
    %79 = vector.multi_reduction <add>, %78, %cst_35 [1] : vector<16x16xf32> to vector<16xf32>
    %80 = vector.shape_cast %79 : vector<16xf32> to vector<16x1xf32>
    %81 = tpu.reciprocal %80 {approx = true} : vector<16x1xf32> -> vector<16x1xf32>
    %82 = vector.broadcast %81 : vector<16x1xf32> to vector<16x16xf32>
    %83 = arith.mulf %78, %82 : vector<16x16xf32>
    %84 = vector.extract_strided_slice %42 {offsets = [0, 8], sizes = [16, 8], strides = [1, 1]} : vector<16x32xf32> to vector<16x8xf32>
    %85 = arith.truncf %83 : vector<16x16xf32> to vector<16x16xbf16>
    %86 = arith.truncf %84 : vector<16x8xf32> to vector<16x8xbf16>
    %cst_36 = arith.constant dense<0.000000e+00> : vector<16x8xf32>
    %87 = tpu.matmul %85, %86, %cst_36 {dimension_numbers = #tpu.dot_dimension_numbers<[1], [0], [0], [1], [0, 0, 1, 1], [], []>} : vector<16x16xbf16>, vector<16x8xbf16>, vector<16x8xf32> -> vector<16x8xf32>
    %c0_37 = arith.constant 0 : index
    %c8 = arith.constant 8 : index
    %88 = vector.load %arg25[%c0_37, %c8] : memref<16x32xf32, #tpu.memory_space<vmem>>, vector<16x8xf32>
    tpu.vector_store %arg25[%c0_37, %c8], %87 {strides = array<i32>} : memref<16x32xf32, #tpu.memory_space<vmem>>, vector<16x8xf32>,
    %89 = vector.extract_strided_slice %40 {offsets = [0, 16], sizes = [16, 8], strides = [1, 1]} : vector<16x32xf32> to vector<16x8xf32>
    %90 = vector.extract_strided_slice %41 {offsets = [0, 16], sizes = [16, 8], strides = [1, 1]} : vector<16x32xf32> to vector<16x8xf32>
    %91 = arith.truncf %89 : vector<16x8xf32> to vector<16x8xbf16>
    %92 = arith.truncf %90 : vector<16x8xf32> to vector<16x8xbf16>
    %cst_38 = arith.constant dense<0.000000e+00> : vector<16x16xf32>
    %93 = tpu.matmul %91, %92, %cst_38 {dimension_numbers = #tpu.dot_dimension_numbers<[1], [1], [0], [0], [0, 0, 1, 0], [], []>} : vector<16x8xbf16>, vector<16x8xbf16>, vector<16x16xf32> -> vector<16x16xf32>
    %cst_39 = arith.constant 0.353553385 : f32
    %94 = vector.broadcast %cst_39 : f32 to vector<16x16xf32>
    %95 = arith.mulf %93, %94 : vector<16x16xf32>
    %96 = arith.addf %95, %32 : vector<16x16xf32>
    %cst_40 = arith.constant dense<0xFF800000> : vector<16xf32>
    %97 = vector.multi_reduction <maximumf>, %96, %cst_40 [1] : vector<16x16xf32> to vector<16xf32>
    %98 = vector.shape_cast %97 : vector<16xf32> to vector<16x1xf32>
    %99 = vector.broadcast %98 : vector<16x1xf32> to vector<16x16xf32>
    %100 = arith.subf %96, %99 : vector<16x16xf32>
    %101 = math.exp %100 : vector<16x16xf32>
    %cst_41 = arith.constant dense<0.000000e+00> : vector<16xf32>
    %102 = vector.multi_reduction <add>, %101, %cst_41 [1] : vector<16x16xf32> to vector<16xf32>
    %103 = vector.shape_cast %102 : vector<16xf32> to vector<16x1xf32>
    %104 = tpu.reciprocal %103 {approx = true} : vector<16x1xf32> -> vector<16x1xf32>
    %105 = vector.broadcast %104 : vector<16x1xf32> to vector<16x16xf32>
    %106 = arith.mulf %101, %105 : vector<16x16xf32>
    %107 = vector.extract_strided_slice %42 {offsets = [0, 16], sizes = [16, 8], strides = [1, 1]} : vector<16x32xf32> to vector<16x8xf32>
    %108 = arith.truncf %106 : vector<16x16xf32> to vector<16x16xbf16>
    %109 = arith.truncf %107 : vector<16x8xf32> to vector<16x8xbf16>
    %cst_42 = arith.constant dense<0.000000e+00> : vector<16x8xf32>
    %110 = tpu.matmul %108, %109, %cst_42 {dimension_numbers = #tpu.dot_dimension_numbers<[1], [0], [0], [1], [0, 0, 1, 1], [], []>} : vector<16x16xbf16>, vector<16x8xbf16>, vector<16x8xf32> -> vector<16x8xf32>
    %c0_43 = arith.constant 0 : index
    %c16 = arith.constant 16 : index
    %111 = vector.load %arg25[%c0_43, %c16] : memref<16x32xf32, #tpu.memory_space<vmem>>, vector<16x8xf32>
    tpu.vector_store %arg25[%c0_43, %c16], %110 {strides = array<i32>} : memref<16x32xf32, #tpu.memory_space<vmem>>, vector<16x8xf32>,
    %112 = vector.extract_strided_slice %40 {offsets = [0, 24], sizes = [16, 8], strides = [1, 1]} : vector<16x32xf32> to vector<16x8xf32>
    %113 = vector.extract_strided_slice %41 {offsets = [0, 24], sizes = [16, 8], strides = [1, 1]} : vector<16x32xf32> to vector<16x8xf32>
    %114 = arith.truncf %112 : vector<16x8xf32> to vector<16x8xbf16>
    %115 = arith.truncf %113 : vector<16x8xf32> to vector<16x8xbf16>
    %cst_44 = arith.constant dense<0.000000e+00> : vector<16x16xf32>
    %116 = tpu.matmul %114, %115, %cst_44 {dimension_numbers = #tpu.dot_dimension_numbers<[1], [1], [0], [0], [0, 0, 1, 0], [], []>} : vector<16x8xbf16>, vector<16x8xbf16>, vector<16x16xf32> -> vector<16x16xf32>
    %cst_45 = arith.constant 0.353553385 : f32
    %117 = vector.broadcast %cst_45 : f32 to vector<16x16xf32>
    %118 = arith.mulf %116, %117 : vector<16x16xf32>
    %119 = arith.addf %118, %32 : vector<16x16xf32>
    %cst_46 = arith.constant dense<0xFF800000> : vector<16xf32>
    %120 = vector.multi_reduction <maximumf>, %119, %cst_46 [1] : vector<16x16xf32> to vector<16xf32>
    %121 = vector.shape_cast %120 : vector<16xf32> to vector<16x1xf32>
    %122 = vector.broadcast %121 : vector<16x1xf32> to vector<16x16xf32>
    %123 = arith.subf %119, %122 : vector<16x16xf32>
    %124 = math.exp %123 : vector<16x16xf32>
    %cst_47 = arith.constant dense<0.000000e+00> : vector<16xf32>
    %125 = vector.multi_reduction <add>, %124, %cst_47 [1] : vector<16x16xf32> to vector<16xf32>
    %126 = vector.shape_cast %125 : vector<16xf32> to vector<16x1xf32>
    %127 = tpu.reciprocal %126 {approx = true} : vector<16x1xf32> -> vector<16x1xf32>
    %128 = vector.broadcast %127 : vector<16x1xf32> to vector<16x16xf32>
    %129 = arith.mulf %124, %128 : vector<16x16xf32>
    %130 = vector.extract_strided_slice %42 {offsets = [0, 24], sizes = [16, 8], strides = [1, 1]} : vector<16x32xf32> to vector<16x8xf32>
    %131 = arith.truncf %129 : vector<16x16xf32> to vector<16x16xbf16>
    %132 = arith.truncf %130 : vector<16x8xf32> to vector<16x8xbf16>
    %cst_48 = arith.constant dense<0.000000e+00> : vector<16x8xf32>
    %133 = tpu.matmul %131, %132, %cst_48 {dimension_numbers = #tpu.dot_dimension_numbers<[1], [0], [0], [1], [0, 0, 1, 1], [], []>} : vector<16x16xbf16>, vector<16x8xbf16>, vector<16x8xf32> -> vector<16x8xf32>
    %c0_49 = arith.constant 0 : index
    %c24 = arith.constant 24 : index
    %134 = vector.load %arg25[%c0_49, %c24] : memref<16x32xf32, #tpu.memory_space<vmem>>, vector<16x8xf32>
    tpu.vector_store %arg25[%c0_49, %c24], %133 {strides = array<i32>} : memref<16x32xf32, #tpu.memory_space<vmem>>, vector<16x8xf32>,
    %c0_50 = arith.constant 0 : index
    %c0_51 = arith.constant 0 : index
    %135 = vector.load %arg25[%c0_50, %c0_51] : memref<16x32xf32, #tpu.memory_space<vmem>>, vector<16x32xf32>
    %c0_52 = arith.constant 0 : index
    %c0_53 = arith.constant 0 : index
    %136 = vector.load %arg9[%c0_52, %c0_53] : memref<32x32xbf16, #tpu.memory_space<vmem>>, vector<32x32xbf16>
    %137 = arith.truncf %135 : vector<16x32xf32> to vector<16x32xbf16>
    %cst_54 = arith.constant dense<0.000000e+00> : vector<16x32xf32>
    %138 = tpu.matmul %137, %136, %cst_54 {dimension_numbers = #tpu.dot_dimension_numbers<[1], [0], [0], [1], [0, 0, 1, 1], [], []>} : vector<16x32xbf16>, vector<32x32xbf16>, vector<16x32xf32> -> vector<16x32xf32>
    %c0_55 = arith.constant 0 : index
    %c0_56 = arith.constant 0 : index
    %139 = vector.load %arg10[%c0_55, %c0_56] : memref<1x32xf32, #tpu.memory_space<vmem>>, vector<1x32xf32>
    %140 = vector.broadcast %139 : vector<1x32xf32> to vector<16x32xf32>
    %141 = arith.addf %138, %140 : vector<16x32xf32>
    %142 = arith.addf %33, %141 : vector<16x32xf32>
    %c0_57 = arith.constant 0 : index
    %c0_58 = arith.constant 0 : index
    %143 = vector.load %arg11[%c0_57, %c0_58] : memref<1x32xf32, #tpu.memory_space<vmem>>, vector<1x32xf32>
    %c0_59 = arith.constant 0 : index
    %c0_60 = arith.constant 0 : index
    %144 = vector.load %arg12[%c0_59, %c0_60] : memref<1x32xf32, #tpu.memory_space<vmem>>, vector<1x32xf32>
    %cst_61 = arith.constant dense<0.000000e+00> : vector<16xf32>
    %145 = vector.multi_reduction <add>, %142, %cst_61 [1] : vector<16x32xf32> to vector<16xf32>
    %146 = vector.shape_cast %145 : vector<16xf32> to vector<16x1xf32>
    %cst_62 = arith.constant 3.200000e+01 : f32
    %147 = vector.broadcast %cst_62 : f32 to vector<16x1xf32>
    %148 = arith.divf %146, %147 : vector<16x1xf32>
    %149 = vector.broadcast %148 : vector<16x1xf32> to vector<16x32xf32>
    %150 = arith.subf %142, %149 : vector<16x32xf32>
    %151 = arith.mulf %150, %150 : vector<16x32xf32>
    %cst_63 = arith.constant dense<0.000000e+00> : vector<16xf32>
    %152 = vector.multi_reduction <add>, %151, %cst_63 [1] : vector<16x32xf32> to vector<16xf32>
    %153 = vector.shape_cast %152 : vector<16xf32> to vector<16x1xf32>
    %cst_64 = arith.constant 3.200000e+01 : f32
    %154 = vector.broadcast %cst_64 : f32 to vector<16x1xf32>
    %155 = arith.divf %153, %154 : vector<16x1xf32>
    %156 = vector.broadcast %148 : vector<16x1xf32> to vector<16x32xf32>
    %157 = arith.subf %142, %156 : vector<16x32xf32>
    %cst_65 = arith.constant 9.99999996E-13 : f32
    %158 = vector.broadcast %cst_65 : f32 to vector<16x1xf32>
    %159 = arith.addf %155, %158 : vector<16x1xf32>
    %160 = math.rsqrt %159 : vector<16x1xf32>
    %161 = vector.broadcast %160 : vector<16x1xf32> to vector<16x32xf32>
    %162 = arith.mulf %157, %161 : vector<16x32xf32>
    %163 = vector.broadcast %143 : vector<1x32xf32> to vector<16x32xf32>
    %164 = arith.mulf %162, %163 : vector<16x32xf32>
    %165 = vector.broadcast %144 : vector<1x32xf32> to vector<16x32xf32>
    %166 = arith.addf %164, %165 : vector<16x32xf32>
    %c0_66 = arith.constant 0 : index
    %c0_67 = arith.constant 0 : index
    %167 = vector.load %arg13[%c0_66, %c0_67] : memref<32x64xbf16, #tpu.memory_space<vmem>>, vector<32x64xbf16>
    %168 = arith.truncf %166 : vector<16x32xf32> to vector<16x32xbf16>
    %cst_68 = arith.constant dense<0.000000e+00> : vector<16x64xf32>
    %169 = tpu.matmul %168, %167, %cst_68 {dimension_numbers = #tpu.dot_dimension_numbers<[1], [0], [0], [1], [0, 0, 1, 1], [], []>} : vector<16x32xbf16>, vector<32x64xbf16>, vector<16x64xf32> -> vector<16x64xf32>
    %c0_69 = arith.constant 0 : index
    %c0_70 = arith.constant 0 : index
    %170 = vector.load %arg14[%c0_69, %c0_70] : memref<1x64xf32, #tpu.memory_space<vmem>>, vector<1x64xf32>
    %171 = vector.broadcast %170 : vector<1x64xf32> to vector<16x64xf32>
    %172 = arith.addf %169, %171 : vector<16x64xf32>
    %173 = arith.mulf %172, %172 : vector<16x64xf32>
    %174 = arith.mulf %172, %173 : vector<16x64xf32>
    %cst_71 = arith.constant 4.471500e-02 : f32
    %175 = vector.broadcast %cst_71 : f32 to vector<16x64xf32>
    %176 = arith.mulf %175, %174 : vector<16x64xf32>
    %177 = arith.addf %172, %176 : vector<16x64xf32>
    %cst_72 = arith.constant 0.797884583 : f32
    %178 = vector.broadcast %cst_72 : f32 to vector<16x64xf32>
    %179 = arith.mulf %178, %177 : vector<16x64xf32>
    %180 = math.tanh %179 : vector<16x64xf32>
    %cst_73 = arith.constant 1.000000e+00 : f32
    %181 = vector.broadcast %cst_73 : f32 to vector<16x64xf32>
    %182 = arith.addf %181, %180 : vector<16x64xf32>
    %cst_74 = arith.constant 5.000000e-01 : f32
    %183 = vector.broadcast %cst_74 : f32 to vector<16x64xf32>
    %184 = arith.mulf %183, %182 : vector<16x64xf32>
    %185 = arith.mulf %172, %184 : vector<16x64xf32>
    %c0_75 = arith.constant 0 : index
    %c0_76 = arith.constant 0 : index
    %186 = vector.load %arg15[%c0_75, %c0_76] : memref<64x32xbf16, #tpu.memory_space<vmem>>, vector<64x32xbf16>
    %187 = arith.truncf %185 : vector<16x64xf32> to vector<16x64xbf16>
    %cst_77 = arith.constant dense<0.000000e+00> : vector<16x32xf32>
    %188 = tpu.matmul %187, %186, %cst_77 {dimension_numbers = #tpu.dot_dimension_numbers<[1], [0], [0], [1], [0, 0, 1, 1], [], []>} : vector<16x64xbf16>, vector<64x32xbf16>, vector<16x32xf32> -> vector<16x32xf32>
    %c0_78 = arith.constant 0 : index
    %c0_79 = arith.constant 0 : index
    %189 = vector.load %arg16[%c0_78, %c0_79] : memref<1x32xf32, #tpu.memory_space<vmem>>, vector<1x32xf32>
    %190 = vector.broadcast %189 : vector<1x32xf32> to vector<16x32xf32>
    %191 = arith.addf %188, %190 : vector<16x32xf32>
    %192 = arith.addf %166, %191 : vector<16x32xf32>
    %c0_80 = arith.constant 0 : index
    %c0_81 = arith.constant 0 : index
    %193 = vector.load %arg17[%c0_80, %c0_81] : memref<1x32xf32, #tpu.memory_space<vmem>>, vector<1x32xf32>
    %c0_82 = arith.constant 0 : index
    %c0_83 = arith.constant 0 : index
    %194 = vector.load %arg18[%c0_82, %c0_83] : memref<1x32xf32, #tpu.memory_space<vmem>>, vector<1x32xf32>
    %cst_84 = arith.constant dense<0.000000e+00> : vector<16xf32>
    %195 = vector.multi_reduction <add>, %192, %cst_84 [1] : vector<16x32xf32> to vector<16xf32>
    %196 = vector.shape_cast %195 : vector<16xf32> to vector<16x1xf32>
    %cst_85 = arith.constant 3.200000e+01 : f32
    %197 = vector.broadcast %cst_85 : f32 to vector<16x1xf32>
    %198 = arith.divf %196, %197 : vector<16x1xf32>
    %199 = vector.broadcast %198 : vector<16x1xf32> to vector<16x32xf32>
    %200 = arith.subf %192, %199 : vector<16x32xf32>
    %201 = arith.mulf %200, %200 : vector<16x32xf32>
    %cst_86 = arith.constant dense<0.000000e+00> : vector<16xf32>
    %202 = vector.multi_reduction <add>, %201, %cst_86 [1] : vector<16x32xf32> to vector<16xf32>
    %203 = vector.shape_cast %202 : vector<16xf32> to vector<16x1xf32>
    %cst_87 = arith.constant 3.200000e+01 : f32
    %204 = vector.broadcast %cst_87 : f32 to vector<16x1xf32>
    %205 = arith.divf %203, %204 : vector<16x1xf32>
    %206 = vector.broadcast %198 : vector<16x1xf32> to vector<16x32xf32>
    %207 = arith.subf %192, %206 : vector<16x32xf32>
    %cst_88 = arith.constant 9.99999996E-13 : f32
    %208 = vector.broadcast %cst_88 : f32 to vector<16x1xf32>
    %209 = arith.addf %205, %208 : vector<16x1xf32>
    %210 = math.rsqrt %209 : vector<16x1xf32>
    %211 = vector.broadcast %210 : vector<16x1xf32> to vector<16x32xf32>
    %212 = arith.mulf %207, %211 : vector<16x32xf32>
    %213 = vector.broadcast %193 : vector<1x32xf32> to vector<16x32xf32>
    %214 = arith.mulf %212, %213 : vector<16x32xf32>
    %215 = vector.broadcast %194 : vector<1x32xf32> to vector<16x32xf32>
    %216 = arith.addf %214, %215 : vector<16x32xf32>
    %c0_89 = arith.constant 0 : index
    %c0_90 = arith.constant 0 : index
    %217 = vector.load %arg24[%c0_89, %c0_90] : memref<16x32xf32, #tpu.memory_space<vmem>>, vector<16x32xf32>
    tpu.vector_store %arg24[%c0_89, %c0_90], %216 {strides = array<i32>} : memref<16x32xf32, #tpu.memory_space<vmem>>, vector<16x32xf32>,
    %c0_91 = arith.constant 0 : index
    %c0_92 = arith.constant 0 : index
    %218 = vector.load %arg24[%c0_91, %c0_92] : memref<16x32xf32, #tpu.memory_space<vmem>>, vector<16x32xf32>
    %c0_93 = arith.constant 0 : index
    %c0_94 = arith.constant 0 : index
    %219 = vector.load %arg7[%c0_93, %c0_94] : memref<32x96xbf16, #tpu.memory_space<vmem>>, vector<32x96xbf16>
    %220 = arith.truncf %218 : vector<16x32xf32> to vector<16x32xbf16>
    %cst_95 = arith.constant dense<0.000000e+00> : vector<16x96xf32>
    %221 = tpu.matmul %220, %219, %cst_95 {dimension_numbers = #tpu.dot_dimension_numbers<[1], [0], [0], [1], [0, 0, 1, 1], [], []>} : vector<16x32xbf16>, vector<32x96xbf16>, vector<16x96xf32> -> vector<16x96xf32>
    %c0_96 = arith.constant 0 : index
    %c0_97 = arith.constant 0 : index
    %222 = vector.load %arg8[%c0_96, %c0_97] : memref<1x96xf32, #tpu.memory_space<vmem>>, vector<1x96xf32>
    %223 = vector.broadcast %222 : vector<1x96xf32> to vector<16x96xf32>
    %224 = arith.addf %221, %223 : vector<16x96xf32>
    %225 = vector.extract_strided_slice %224 {offsets = [0, 0], sizes = [16, 32], strides = [1, 1]} : vector<16x96xf32> to vector<16x32xf32>
    %226 = vector.extract_strided_slice %224 {offsets = [0, 32], sizes = [16, 32], strides = [1, 1]} : vector<16x96xf32> to vector<16x32xf32>
    %227 = vector.extract_strided_slice %224 {offsets = [0, 64], sizes = [16, 32], strides = [1, 1]} : vector<16x96xf32> to vector<16x32xf32>
    %228 = vector.extract_strided_slice %225 {offsets = [0, 0], sizes = [16, 8], strides = [1, 1]} : vector<16x32xf32> to vector<16x8xf32>
    %229 = vector.extract_strided_slice %226 {offsets = [0, 0], sizes = [16, 8], strides = [1, 1]} : vector<16x32xf32> to vector<16x8xf32>
    %230 = arith.truncf %228 : vector<16x8xf32> to vector<16x8xbf16>
    %231 = arith.truncf %229 : vector<16x8xf32> to vector<16x8xbf16>
    %cst_98 = arith.constant dense<0.000000e+00> : vector<16x16xf32>
    %232 = tpu.matmul %230, %231, %cst_98 {dimension_numbers = #tpu.dot_dimension_numbers<[1], [1], [0], [0], [0, 0, 1, 0], [], []>} : vector<16x8xbf16>, vector<16x8xbf16>, vector<16x16xf32> -> vector<16x16xf32>
    %cst_99 = arith.constant 0.353553385 : f32
    %233 = vector.broadcast %cst_99 : f32 to vector<16x16xf32>
    %234 = arith.mulf %232, %233 : vector<16x16xf32>
    %235 = arith.addf %234, %32 : vector<16x16xf32>
    %cst_100 = arith.constant dense<0xFF800000> : vector<16xf32>
    %236 = vector.multi_reduction <maximumf>, %235, %cst_100 [1] : vector<16x16xf32> to vector<16xf32>
    %237 = vector.shape_cast %236 : vector<16xf32> to vector<16x1xf32>
    %238 = vector.broadcast %237 : vector<16x1xf32> to vector<16x16xf32>
    %239 = arith.subf %235, %238 : vector<16x16xf32>
    %240 = math.exp %239 : vector<16x16xf32>
    %cst_101 = arith.constant dense<0.000000e+00> : vector<16xf32>
    %241 = vector.multi_reduction <add>, %240, %cst_101 [1] : vector<16x16xf32> to vector<16xf32>
    %242 = vector.shape_cast %241 : vector<16xf32> to vector<16x1xf32>
    %243 = tpu.reciprocal %242 {approx = true} : vector<16x1xf32> -> vector<16x1xf32>
    %244 = vector.broadcast %243 : vector<16x1xf32> to vector<16x16xf32>
    %245 = arith.mulf %240, %244 : vector<16x16xf32>
    %246 = vector.extract_strided_slice %227 {offsets = [0, 0], sizes = [16, 8], strides = [1, 1]} : vector<16x32xf32> to vector<16x8xf32>
    %247 = arith.truncf %245 : vector<16x16xf32> to vector<16x16xbf16>
    %248 = arith.truncf %246 : vector<16x8xf32> to vector<16x8xbf16>
    %cst_102 = arith.constant dense<0.000000e+00> : vector<16x8xf32>
    %249 = tpu.matmul %247, %248, %cst_102 {dimension_numbers = #tpu.dot_dimension_numbers<[1], [0], [0], [1], [0, 0, 1, 1], [], []>} : vector<16x16xbf16>, vector<16x8xbf16>, vector<16x8xf32> -> vector<16x8xf32>
    %c0_103 = arith.constant 0 : index
    %c0_104 = arith.constant 0 : index
    %250 = vector.load %arg25[%c0_103, %c0_104] : memref<16x32xf32, #tpu.memory_space<vmem>>, vector<16x8xf32>
    tpu.vector_store %arg25[%c0_103, %c0_104], %249 {strides = array<i32>} : memref<16x32xf32, #tpu.memory_space<vmem>>, vector<16x8xf32>,
    %251 = vector.extract_strided_slice %225 {offsets = [0, 8], sizes = [16, 8], strides = [1, 1]} : vector<16x32xf32> to vector<16x8xf32>
    %252 = vector.extract_strided_slice %226 {offsets = [0, 8], sizes = [16, 8], strides = [1, 1]} : vector<16x32xf32> to vector<16x8xf32>
    %253 = arith.truncf %251 : vector<16x8xf32> to vector<16x8xbf16>
    %254 = arith.truncf %252 : vector<16x8xf32> to vector<16x8xbf16>
    %cst_105 = arith.constant dense<0.000000e+00> : vector<16x16xf32>
    %255 = tpu.matmul %253, %254, %cst_105 {dimension_numbers = #tpu.dot_dimension_numbers<[1], [1], [0], [0], [0, 0, 1, 0], [], []>} : vector<16x8xbf16>, vector<16x8xbf16>, vector<16x16xf32> -> vector<16x16xf32>
    %cst_106 = arith.constant 0.353553385 : f32
    %256 = vector.broadcast %cst_106 : f32 to vector<16x16xf32>
    %257 = arith.mulf %255, %256 : vector<16x16xf32>
    %258 = arith.addf %257, %32 : vector<16x16xf32>
    %cst_107 = arith.constant dense<0xFF800000> : vector<16xf32>
    %259 = vector.multi_reduction <maximumf>, %258, %cst_107 [1] : vector<16x16xf32> to vector<16xf32>
    %260 = vector.shape_cast %259 : vector<16xf32> to vector<16x1xf32>
    %261 = vector.broadcast %260 : vector<16x1xf32> to vector<16x16xf32>
    %262 = arith.subf %258, %261 : vector<16x16xf32>
    %263 = math.exp %262 : vector<16x16xf32>
    %cst_108 = arith.constant dense<0.000000e+00> : vector<16xf32>
    %264 = vector.multi_reduction <add>, %263, %cst_108 [1] : vector<16x16xf32> to vector<16xf32>
    %265 = vector.shape_cast %264 : vector<16xf32> to vector<16x1xf32>
    %266 = tpu.reciprocal %265 {approx = true} : vector<16x1xf32> -> vector<16x1xf32>
    %267 = vector.broadcast %266 : vector<16x1xf32> to vector<16x16xf32>
    %268 = arith.mulf %263, %267 : vector<16x16xf32>
    %269 = vector.extract_strided_slice %227 {offsets = [0, 8], sizes = [16, 8], strides = [1, 1]} : vector<16x32xf32> to vector<16x8xf32>
    %270 = arith.truncf %268 : vector<16x16xf32> to vector<16x16xbf16>
    %271 = arith.truncf %269 : vector<16x8xf32> to vector<16x8xbf16>
    %cst_109 = arith.constant dense<0.000000e+00> : vector<16x8xf32>
    %272 = tpu.matmul %270, %271, %cst_109 {dimension_numbers = #tpu.dot_dimension_numbers<[1], [0], [0], [1], [0, 0, 1, 1], [], []>} : vector<16x16xbf16>, vector<16x8xbf16>, vector<16x8xf32> -> vector<16x8xf32>
    %c0_110 = arith.constant 0 : index
    %c8_111 = arith.constant 8 : index
    %273 = vector.load %arg25[%c0_110, %c8_111] : memref<16x32xf32, #tpu.memory_space<vmem>>, vector<16x8xf32>
    tpu.vector_store %arg25[%c0_110, %c8_111], %272 {strides = array<i32>} : memref<16x32xf32, #tpu.memory_space<vmem>>, vector<16x8xf32>,
    %274 = vector.extract_strided_slice %225 {offsets = [0, 16], sizes = [16, 8], strides = [1, 1]} : vector<16x32xf32> to vector<16x8xf32>
    %275 = vector.extract_strided_slice %226 {offsets = [0, 16], sizes = [16, 8], strides = [1, 1]} : vector<16x32xf32> to vector<16x8xf32>
    %276 = arith.truncf %274 : vector<16x8xf32> to vector<16x8xbf16>
    %277 = arith.truncf %275 : vector<16x8xf32> to vector<16x8xbf16>
    %cst_112 = arith.constant dense<0.000000e+00> : vector<16x16xf32>
    %278 = tpu.matmul %276, %277, %cst_112 {dimension_numbers = #tpu.dot_dimension_numbers<[1], [1], [0], [0], [0, 0, 1, 0], [], []>} : vector<16x8xbf16>, vector<16x8xbf16>, vector<16x16xf32> -> vector<16x16xf32>
    %cst_113 = arith.constant 0.353553385 : f32
    %279 = vector.broadcast %cst_113 : f32 to vector<16x16xf32>
    %280 = arith.mulf %278, %279 : vector<16x16xf32>
    %281 = arith.addf %280, %32 : vector<16x16xf32>
    %cst_114 = arith.constant dense<0xFF800000> : vector<16xf32>
    %282 = vector.multi_reduction <maximumf>, %281, %cst_114 [1] : vector<16x16xf32> to vector<16xf32>
    %283 = vector.shape_cast %282 : vector<16xf32> to vector<16x1xf32>
    %284 = vector.broadcast %283 : vector<16x1xf32> to vector<16x16xf32>
    %285 = arith.subf %281, %284 : vector<16x16xf32>
    %286 = math.exp %285 : vector<16x16xf32>
    %cst_115 = arith.constant dense<0.000000e+00> : vector<16xf32>
    %287 = vector.multi_reduction <add>, %286, %cst_115 [1] : vector<16x16xf32> to vector<16xf32>
    %288 = vector.shape_cast %287 : vector<16xf32> to vector<16x1xf32>
    %289 = tpu.reciprocal %288 {approx = true} : vector<16x1xf32> -> vector<16x1xf32>
    %290 = vector.broadcast %289 : vector<16x1xf32> to vector<16x16xf32>
    %291 = arith.mulf %286, %290 : vector<16x16xf32>
    %292 = vector.extract_strided_slice %227 {offsets = [0, 16], sizes = [16, 8], strides = [1, 1]} : vector<16x32xf32> to vector<16x8xf32>
    %293 = arith.truncf %291 : vector<16x16xf32> to vector<16x16xbf16>
    %294 = arith.truncf %292 : vector<16x8xf32> to vector<16x8xbf16>
    %cst_116 = arith.constant dense<0.000000e+00> : vector<16x8xf32>
    %295 = tpu.matmul %293, %294, %cst_116 {dimension_numbers = #tpu.dot_dimension_numbers<[1], [0], [0], [1], [0, 0, 1, 1], [], []>} : vector<16x16xbf16>, vector<16x8xbf16>, vector<16x8xf32> -> vector<16x8xf32>
    %c0_117 = arith.constant 0 : index
    %c16_118 = arith.constant 16 : index
    %296 = vector.load %arg25[%c0_117, %c16_118] : memref<16x32xf32, #tpu.memory_space<vmem>>, vector<16x8xf32>
    tpu.vector_store %arg25[%c0_117, %c16_118], %295 {strides = array<i32>} : memref<16x32xf32, #tpu.memory_space<vmem>>, vector<16x8xf32>,
    %297 = vector.extract_strided_slice %225 {offsets = [0, 24], sizes = [16, 8], strides = [1, 1]} : vector<16x32xf32> to vector<16x8xf32>
    %298 = vector.extract_strided_slice %226 {offsets = [0, 24], sizes = [16, 8], strides = [1, 1]} : vector<16x32xf32> to vector<16x8xf32>
    %299 = arith.truncf %297 : vector<16x8xf32> to vector<16x8xbf16>
    %300 = arith.truncf %298 : vector<16x8xf32> to vector<16x8xbf16>
    %cst_119 = arith.constant dense<0.000000e+00> : vector<16x16xf32>
    %301 = tpu.matmul %299, %300, %cst_119 {dimension_numbers = #tpu.dot_dimension_numbers<[1], [1], [0], [0], [0, 0, 1, 0], [], []>} : vector<16x8xbf16>, vector<16x8xbf16>, vector<16x16xf32> -> vector<16x16xf32>
    %cst_120 = arith.constant 0.353553385 : f32
    %302 = vector.broadcast %cst_120 : f32 to vector<16x16xf32>
    %303 = arith.mulf %301, %302 : vector<16x16xf32>
    %304 = arith.addf %303, %32 : vector<16x16xf32>
    %cst_121 = arith.constant dense<0xFF800000> : vector<16xf32>
    %305 = vector.multi_reduction <maximumf>, %304, %cst_121 [1] : vector<16x16xf32> to vector<16xf32>
    %306 = vector.shape_cast %305 : vector<16xf32> to vector<16x1xf32>
    %307 = vector.broadcast %306 : vector<16x1xf32> to vector<16x16xf32>
    %308 = arith.subf %304, %307 : vector<16x16xf32>
    %309 = math.exp %308 : vector<16x16xf32>
    %cst_122 = arith.constant dense<0.000000e+00> : vector<16xf32>
    %310 = vector.multi_reduction <add>, %309, %cst_122 [1] : vector<16x16xf32> to vector<16xf32>
    %311 = vector.shape_cast %310 : vector<16xf32> to vector<16x1xf32>
    %312 = tpu.reciprocal %311 {approx = true} : vector<16x1xf32> -> vector<16x1xf32>
    %313 = vector.broadcast %312 : vector<16x1xf32> to vector<16x16xf32>
    %314 = arith.mulf %309, %313 : vector<16x16xf32>
    %315 = vector.extract_strided_slice %227 {offsets = [0, 24], sizes = [16, 8], strides = [1, 1]} : vector<16x32xf32> to vector<16x8xf32>
    %316 = arith.truncf %314 : vector<16x16xf32> to vector<16x16xbf16>
    %317 = arith.truncf %315 : vector<16x8xf32> to vector<16x8xbf16>
    %cst_123 = arith.constant dense<0.000000e+00> : vector<16x8xf32>
    %318 = tpu.matmul %316, %317, %cst_123 {dimension_numbers = #tpu.dot_dimension_numbers<[1], [0], [0], [1], [0, 0, 1, 1], [], []>} : vector<16x16xbf16>, vector<16x8xbf16>, vector<16x8xf32> -> vector<16x8xf32>
    %c0_124 = arith.constant 0 : index
    %c24_125 = arith.constant 24 : index
    %319 = vector.load %arg25[%c0_124, %c24_125] : memref<16x32xf32, #tpu.memory_space<vmem>>, vector<16x8xf32>
    tpu.vector_store %arg25[%c0_124, %c24_125], %318 {strides = array<i32>} : memref<16x32xf32, #tpu.memory_space<vmem>>, vector<16x8xf32>,
    %c0_126 = arith.constant 0 : index
    %c0_127 = arith.constant 0 : index
    %320 = vector.load %arg25[%c0_126, %c0_127] : memref<16x32xf32, #tpu.memory_space<vmem>>, vector<16x32xf32>
    %c0_128 = arith.constant 0 : index
    %c0_129 = arith.constant 0 : index
    %321 = vector.load %arg9[%c0_128, %c0_129] : memref<32x32xbf16, #tpu.memory_space<vmem>>, vector<32x32xbf16>
    %322 = arith.truncf %320 : vector<16x32xf32> to vector<16x32xbf16>
    %cst_130 = arith.constant dense<0.000000e+00> : vector<16x32xf32>
    %323 = tpu.matmul %322, %321, %cst_130 {dimension_numbers = #tpu.dot_dimension_numbers<[1], [0], [0], [1], [0, 0, 1, 1], [], []>} : vector<16x32xbf16>, vector<32x32xbf16>, vector<16x32xf32> -> vector<16x32xf32>
    %c0_131 = arith.constant 0 : index
    %c0_132 = arith.constant 0 : index
    %324 = vector.load %arg10[%c0_131, %c0_132] : memref<1x32xf32, #tpu.memory_space<vmem>>, vector<1x32xf32>
    %325 = vector.broadcast %324 : vector<1x32xf32> to vector<16x32xf32>
    %326 = arith.addf %323, %325 : vector<16x32xf32>
    %327 = arith.addf %218, %326 : vector<16x32xf32>
    %c0_133 = arith.constant 0 : index
    %c0_134 = arith.constant 0 : index
    %328 = vector.load %arg11[%c0_133, %c0_134] : memref<1x32xf32, #tpu.memory_space<vmem>>, vector<1x32xf32>
    %c0_135 = arith.constant 0 : index
    %c0_136 = arith.constant 0 : index
    %329 = vector.load %arg12[%c0_135, %c0_136] : memref<1x32xf32, #tpu.memory_space<vmem>>, vector<1x32xf32>
    %cst_137 = arith.constant dense<0.000000e+00> : vector<16xf32>
    %330 = vector.multi_reduction <add>, %327, %cst_137 [1] : vector<16x32xf32> to vector<16xf32>
    %331 = vector.shape_cast %330 : vector<16xf32> to vector<16x1xf32>
    %cst_138 = arith.constant 3.200000e+01 : f32
    %332 = vector.broadcast %cst_138 : f32 to vector<16x1xf32>
    %333 = arith.divf %331, %332 : vector<16x1xf32>
    %334 = vector.broadcast %333 : vector<16x1xf32> to vector<16x32xf32>
    %335 = arith.subf %327, %334 : vector<16x32xf32>
    %336 = arith.mulf %335, %335 : vector<16x32xf32>
    %cst_139 = arith.constant dense<0.000000e+00> : vector<16xf32>
    %337 = vector.multi_reduction <add>, %336, %cst_139 [1] : vector<16x32xf32> to vector<16xf32>
    %338 = vector.shape_cast %337 : vector<16xf32> to vector<16x1xf32>
    %cst_140 = arith.constant 3.200000e+01 : f32
    %339 = vector.broadcast %cst_140 : f32 to vector<16x1xf32>
    %340 = arith.divf %338, %339 : vector<16x1xf32>
    %341 = vector.broadcast %333 : vector<16x1xf32> to vector<16x32xf32>
    %342 = arith.subf %327, %341 : vector<16x32xf32>
    %cst_141 = arith.constant 9.99999996E-13 : f32
    %343 = vector.broadcast %cst_141 : f32 to vector<16x1xf32>
    %344 = arith.addf %340, %343 : vector<16x1xf32>
    %345 = math.rsqrt %344 : vector<16x1xf32>
    %346 = vector.broadcast %345 : vector<16x1xf32> to vector<16x32xf32>
    %347 = arith.mulf %342, %346 : vector<16x32xf32>
    %348 = vector.broadcast %328 : vector<1x32xf32> to vector<16x32xf32>
    %349 = arith.mulf %347, %348 : vector<16x32xf32>
    %350 = vector.broadcast %329 : vector<1x32xf32> to vector<16x32xf32>
    %351 = arith.addf %349, %350 : vector<16x32xf32>
    %c0_142 = arith.constant 0 : index
    %c0_143 = arith.constant 0 : index
    %352 = vector.load %arg13[%c0_142, %c0_143] : memref<32x64xbf16, #tpu.memory_space<vmem>>, vector<32x64xbf16>
    %353 = arith.truncf %351 : vector<16x32xf32> to vector<16x32xbf16>
    %cst_144 = arith.constant dense<0.000000e+00> : vector<16x64xf32>
    %354 = tpu.matmul %353, %352, %cst_144 {dimension_numbers = #tpu.dot_dimension_numbers<[1], [0], [0], [1], [0, 0, 1, 1], [], []>} : vector<16x32xbf16>, vector<32x64xbf16>, vector<16x64xf32> -> vector<16x64xf32>
    %c0_145 = arith.constant 0 : index
    %c0_146 = arith.constant 0 : index
    %355 = vector.load %arg14[%c0_145, %c0_146] : memref<1x64xf32, #tpu.memory_space<vmem>>, vector<1x64xf32>
    %356 = vector.broadcast %355 : vector<1x64xf32> to vector<16x64xf32>
    %357 = arith.addf %354, %356 : vector<16x64xf32>
    %358 = arith.mulf %357, %357 : vector<16x64xf32>
    %359 = arith.mulf %357, %358 : vector<16x64xf32>
    %cst_147 = arith.constant 4.471500e-02 : f32
    %360 = vector.broadcast %cst_147 : f32 to vector<16x64xf32>
    %361 = arith.mulf %360, %359 : vector<16x64xf32>
    %362 = arith.addf %357, %361 : vector<16x64xf32>
    %cst_148 = arith.constant 0.797884583 : f32
    %363 = vector.broadcast %cst_148 : f32 to vector<16x64xf32>
    %364 = arith.mulf %363, %362 : vector<16x64xf32>
    %365 = math.tanh %364 : vector<16x64xf32>
    %cst_149 = arith.constant 1.000000e+00 : f32
    %366 = vector.broadcast %cst_149 : f32 to vector<16x64xf32>
    %367 = arith.addf %366, %365 : vector<16x64xf32>
    %cst_150 = arith.constant 5.000000e-01 : f32
    %368 = vector.broadcast %cst_150 : f32 to vector<16x64xf32>
    %369 = arith.mulf %368, %367 : vector<16x64xf32>
    %370 = arith.mulf %357, %369 : vector<16x64xf32>
    %c0_151 = arith.constant 0 : index
    %c0_152 = arith.constant 0 : index
    %371 = vector.load %arg15[%c0_151, %c0_152] : memref<64x32xbf16, #tpu.memory_space<vmem>>, vector<64x32xbf16>
    %372 = arith.truncf %370 : vector<16x64xf32> to vector<16x64xbf16>
    %cst_153 = arith.constant dense<0.000000e+00> : vector<16x32xf32>
    %373 = tpu.matmul %372, %371, %cst_153 {dimension_numbers = #tpu.dot_dimension_numbers<[1], [0], [0], [1], [0, 0, 1, 1], [], []>} : vector<16x64xbf16>, vector<64x32xbf16>, vector<16x32xf32> -> vector<16x32xf32>
    %c0_154 = arith.constant 0 : index
    %c0_155 = arith.constant 0 : index
    %374 = vector.load %arg16[%c0_154, %c0_155] : memref<1x32xf32, #tpu.memory_space<vmem>>, vector<1x32xf32>
    %375 = vector.broadcast %374 : vector<1x32xf32> to vector<16x32xf32>
    %376 = arith.addf %373, %375 : vector<16x32xf32>
    %377 = arith.addf %351, %376 : vector<16x32xf32>
    %c0_156 = arith.constant 0 : index
    %c0_157 = arith.constant 0 : index
    %378 = vector.load %arg17[%c0_156, %c0_157] : memref<1x32xf32, #tpu.memory_space<vmem>>, vector<1x32xf32>
    %c0_158 = arith.constant 0 : index
    %c0_159 = arith.constant 0 : index
    %379 = vector.load %arg18[%c0_158, %c0_159] : memref<1x32xf32, #tpu.memory_space<vmem>>, vector<1x32xf32>
    %cst_160 = arith.constant dense<0.000000e+00> : vector<16xf32>
    %380 = vector.multi_reduction <add>, %377, %cst_160 [1] : vector<16x32xf32> to vector<16xf32>
    %381 = vector.shape_cast %380 : vector<16xf32> to vector<16x1xf32>
    %cst_161 = arith.constant 3.200000e+01 : f32
    %382 = vector.broadcast %cst_161 : f32 to vector<16x1xf32>
    %383 = arith.divf %381, %382 : vector<16x1xf32>
    %384 = vector.broadcast %383 : vector<16x1xf32> to vector<16x32xf32>
    %385 = arith.subf %377, %384 : vector<16x32xf32>
    %386 = arith.mulf %385, %385 : vector<16x32xf32>
    %cst_162 = arith.constant dense<0.000000e+00> : vector<16xf32>
    %387 = vector.multi_reduction <add>, %386, %cst_162 [1] : vector<16x32xf32> to vector<16xf32>
    %388 = vector.shape_cast %387 : vector<16xf32> to vector<16x1xf32>
    %cst_163 = arith.constant 3.200000e+01 : f32
    %389 = vector.broadcast %cst_163 : f32 to vector<16x1xf32>
    %390 = arith.divf %388, %389 : vector<16x1xf32>
    %391 = vector.broadcast %383 : vector<16x1xf32> to vector<16x32xf32>
    %392 = arith.subf %377, %391 : vector<16x32xf32>
    %cst_164 = arith.constant 9.99999996E-13 : f32
    %393 = vector.broadcast %cst_164 : f32 to vector<16x1xf32>
    %394 = arith.addf %390, %393 : vector<16x1xf32>
    %395 = math.rsqrt %394 : vector<16x1xf32>
    %396 = vector.broadcast %395 : vector<16x1xf32> to vector<16x32xf32>
    %397 = arith.mulf %392, %396 : vector<16x32xf32>
    %398 = vector.broadcast %378 : vector<1x32xf32> to vector<16x32xf32>
    %399 = arith.mulf %397, %398 : vector<16x32xf32>
    %400 = vector.broadcast %379 : vector<1x32xf32> to vector<16x32xf32>
    %401 = arith.addf %399, %400 : vector<16x32xf32>
    %c0_165 = arith.constant 0 : index
    %c0_166 = arith.constant 0 : index
    %402 = vector.load %arg24[%c0_165, %c0_166] : memref<16x32xf32, #tpu.memory_space<vmem>>, vector<16x32xf32>
    tpu.vector_store %arg24[%c0_165, %c0_166], %401 {strides = array<i32>} : memref<16x32xf32, #tpu.memory_space<vmem>>, vector<16x32xf32>,
    %c0_167 = arith.constant 0 : index
    %c0_168 = arith.constant 0 : index
    %403 = vector.load %arg24[%c0_167, %c0_168] : memref<16x32xf32, #tpu.memory_space<vmem>>, vector<16x32xf32>
    %c0_169 = arith.constant 0 : index
    %c0_170 = arith.constant 0 : index
    %404 = vector.load %arg19[%c0_169, %c0_170] : memref<32x32xbf16, #tpu.memory_space<vmem>>, vector<32x32xbf16>
    %405 = arith.truncf %403 : vector<16x32xf32> to vector<16x32xbf16>
    %cst_171 = arith.constant dense<0.000000e+00> : vector<16x32xf32>
    %406 = tpu.matmul %405, %404, %cst_171 {dimension_numbers = #tpu.dot_dimension_numbers<[1], [0], [0], [1], [0, 0, 1, 1], [], []>} : vector<16x32xbf16>, vector<32x32xbf16>, vector<16x32xf32> -> vector<16x32xf32>
    %c0_172 = arith.constant 0 : index
    %c0_173 = arith.constant 0 : index
    %407 = vector.load %arg20[%c0_172, %c0_173] : memref<1x32xf32, #tpu.memory_space<vmem>>, vector<1x32xf32>
    %408 = vector.broadcast %407 : vector<1x32xf32> to vector<16x32xf32>
    %409 = arith.addf %406, %408 : vector<16x32xf32>
    %410 = math.tanh %409 : vector<16x32xf32>
    %c0_174 = arith.constant 0 : index
    %c0_175 = arith.constant 0 : index
    %411 = vector.load %arg21[%c0_174, %c0_175] : memref<32x128xbf16, #tpu.memory_space<vmem>>, vector<32x128xbf16>
    %412 = arith.truncf %410 : vector<16x32xf32> to vector<16x32xbf16>
    %cst_176 = arith.constant dense<0.000000e+00> : vector<16x128xf32>
    %413 = tpu.matmul %412, %411, %cst_176 {dimension_numbers = #tpu.dot_dimension_numbers<[1], [0], [0], [1], [0, 0, 1, 1], [], []>} : vector<16x32xbf16>, vector<32x128xbf16>, vector<16x128xf32> -> vector<16x128xf32>
    %c0_177 = arith.constant 0 : index
    %c0_178 = arith.constant 0 : index
    %414 = vector.load %arg22[%c0_177, %c0_178] : memref<1x128xf32, #tpu.memory_space<vmem>>, vector<1x128xf32>
    %415 = vector.broadcast %414 : vector<1x128xf32> to vector<16x128xf32>
    %416 = arith.addf %413, %415 : vector<16x128xf32>
    %c0_179 = arith.constant 0 : index
    %c0_180 = arith.constant 0 : index
    %417 = vector.load %arg23[%c0_179, %c0_180] : memref<16x128xf32, #tpu.memory_space<vmem>>, vector<16x128xf32>
    tpu.vector_store %arg23[%c0_179, %c0_180], %416 {strides = array<i32>} : memref<16x128xf32, #tpu.memory_space<vmem>>, vector<16x128xf32>,
    return
  }
  func.func @transform_0(%arg0: i32) -> (i32, i32) {
    %c0_i32 = arith.constant 0 : i32
    %c0_i32_0 = arith.constant 0 : i32
    %c0_i32_1 = arith.constant 0 : i32
    return %c0_i32, %c0_i32_0 : i32, i32
  }
  func.func @transform_1(%arg0: i32) -> (i32, i32) {
    %c0_i32 = arith.constant 0 : i32
    %c0_i32_0 = arith.constant 0 : i32
    %c0_i32_1 = arith.constant 0 : i32
    return %c0_i32, %c0_i32_0 : i32, i32
  }
  func.func @transform_2(%arg0: i32) -> (i32, i32) {
    %c0_i32 = arith.constant 0 : i32
    %c0_i32_0 = arith.constant 0 : i32
    %c0_i32_1 = arith.constant 0 : i32
    return %c0_i32, %c0_i32_0 : i32, i32
  }
  func.func @transform_3(%arg0: i32) -> (i32, i32) {
    %c0_i32 = arith.constant 0 : i32
    %c0_i32_0 = arith.constant 0 : i32
    %c0_i32_1 = arith.constant 0 : i32
    return %c0_i32, %c0_i32_0 : i32, i32
  }
  func.func @transform_4(%arg0: i32) -> (i32, i32) {
    %c0_i32 = arith.constant 0 : i32
    %c0_i32_0 = arith.constant 0 : i32
    %c0_i32_1 = arith.constant 0 : i32
    return %c0_i32, %c0_i32_0 : i32, i32
  }
  func.func @transform_5(%arg0: i32) -> (i32, i32) {
    %c0_i32 = arith.constant 0 : i32
    %c0_i32_0 = arith.constant 0 : i32
    %c0_i32_1 = arith.constant 0 : i32
    return %c0_i32, %c0_i32_0 : i32, i32
  }
  func.func @transform_6(%arg0: i32) -> (i32, i32) {
    %c0_i32 = arith.constant 0 : i32
    %c0_i32_0 = arith.constant 0 : i32
    %c0_i32_1 = arith.constant 0 : i32
    return %c0_i32, %c0_i32_0 : i32, i32
  }
  func.func @transform_7(%arg0: i32) -> (i32, i32) {
    %c0_i32 = arith.constant 0 : i32
    %c0_i32_0 = arith.constant 0 : i32
    %c0_i32_1 = arith.constant 0 : i32
    return %c0_i32, %c0_i32_0 : i32, i32
  }
  func.func @transform_8(%arg0: i32) -> (i32, i32) {
    %c0_i32 = arith.constant 0 : i32
    %c0_i32_0 = arith.constant 0 : i32
    %c0_i32_1 = arith.constant 0 : i32
    return %c0_i32, %c0_i32_0 : i32, i32
  }
  func.func @transform_9(%arg0: i32) -> (i32, i32) {
    %c0_i32 = arith.constant 0 : i32
    %c0_i32_0 = arith.constant 0 : i32
    %c0_i32_1 = arith.constant 0 : i32
    return %c0_i32, %c0_i32_0 : i32, i32
  }
  func.func @transform_10(%arg0: i32) -> (i32, i32) {
    %c0_i32 = arith.constant 0 : i32
    %c0_i32_0 = arith.constant 0 : i32
    %c0_i32_1 = arith.constant 0 : i32
    return %c0_i32, %c0_i32_0 : i32, i32
  }
  func.func @transform_11(%arg0: i32) -> (i32, i32) {
    %c0_i32 = arith.constant 0 : i32
    %c0_i32_0 = arith.constant 0 : i32
    %c0_i32_1 = arith.constant 0 : i32
    return %c0_i32, %c0_i32_0 : i32, i32
  }
  func.func @transform_12(%arg0: i32) -> (i32, i32) {
    %c0_i32 = arith.constant 0 : i32
    %c0_i32_0 = arith.constant 0 : i32
    %c0_i32_1 = arith.constant 0 : i32
    return %c0_i32, %c0_i32_0 : i32, i32
  }
  func.func @transform_13(%arg0: i32) -> (i32, i32) {
    %c0_i32 = arith.constant 0 : i32
    %c0_i32_0 = arith.constant 0 : i32
    %c0_i32_1 = arith.constant 0 : i32
    return %c0_i32, %c0_i32_0 : i32, i32
  }
  func.func @transform_14(%arg0: i32) -> (i32, i32) {
    %c0_i32 = arith.constant 0 : i32
    %c0_i32_0 = arith.constant 0 : i32
    %c0_i32_1 = arith.constant 0 : i32
    return %c0_i32, %c0_i32_0 : i32, i32
  }
  func.func @transform_15(%arg0: i32) -> (i32, i32) {
    %c0_i32 = arith.constant 0 : i32
    %c0_i32_0 = arith.constant 0 : i32
    %c0_i32_1 = arith.constant 0 : i32
    return %c0_i32, %c0_i32_0 : i32, i32
  }
  func.func @transform_16(%arg0: i32) -> (i32, i32) {
    %c0_i32 = arith.constant 0 : i32
    %c0_i32_0 = arith.constant 0 : i32
    %c0_i32_1 = arith.constant 0 : i32
    return %c0_i32, %c0_i32_0 : i32, i32
  }
  func.func @transform_17(%arg0: i32) -> (i32, i32) {
    %c0_i32 = arith.constant 0 : i32
    %c0_i32_0 = arith.constant 0 : i32
    %c0_i32_1 = arith.constant 0 : i32
    return %c0_i32, %c0_i32_0 : i32, i32
  }
  func.func @transform_18(%arg0: i32) -> (i32, i32) {
    %c0_i32 = arith.constant 0 : i32
    %c0_i32_0 = arith.constant 0 : i32
    %c0_i32_1 = arith.constant 0 : i32
    return %c0_i32, %c0_i32_0 : i32, i32
  }
  func.func @transform_19(%arg0: i32) -> (i32, i32) {
    %c0_i32 = arith.constant 0 : i32
    %c0_i32_0 = arith.constant 0 : i32
    %c0_i32_1 = arith.constant 0 : i32
    return %c0_i32, %c0_i32_0 : i32, i32
  }
  func.func @transform_20(%arg0: i32) -> (i32, i32) {
    %c0_i32 = arith.constant 0 : i32
    %c0_i32_0 = arith.constant 0 : i32
    %c0_i32_1 = arith.constant 0 : i32
    return %c0_i32, %c0_i32_0 : i32, i32
  }
  func.func @transform_21(%arg0: i32) -> (i32, i32) {
    %c0_i32 = arith.constant 0 : i32
    %c0_i32_0 = arith.constant 0 : i32
    %c0_i32_1 = arith.constant 0 : i32
    return %c0_i32, %c0_i32_0 : i32, i32
  }
  func.func @transform_22(%arg0: i32) -> (i32, i32) {
    %c0_i32 = arith.constant 0 : i32
    %c0_i32_0 = arith.constant 0 : i32
    %c0_i32_1 = arith.constant 0 : i32
    return %c0_i32, %c0_i32_0 : i32, i32
  }
}

</mosaic_0001>

<llo_original>
// kernel: news_subject_classifier_forward.1
$region0: #{news_subject_classifier_forward.1}
  #allocation0 [shape = 'u32[]', space=smem, size = 0x4, offset = 0x4, fixed_abs, tag = 'smem constant byte address 0x4 - core index']
  #allocation1 [shape = 'u32[72,128]{1,0:T(1,128)}', space=vmem, size = 0x9000, scoped, tag = 'internal scratch']
  #allocation2 [shape = 'f32[16,32]{1,0:T(8,128)}', space=vmem, size = 0x2000, scoped, tag = 'scratch operand']
  #allocation3 [shape = 'f32[16,32]{1,0:T(8,128)}', space=vmem, size = 0x2000, scoped, tag = 'scratch operand']
  %s0 = inlined_call_operand.vmem [shape: f32[16,16], index: 0, kind: input, shape index: {}]
  %s1 = inlined_call_operand.vmem [shape: f32[16,16], index: 1, kind: input, shape index: {}]
  %s2 = inlined_call_operand.vmem [shape: f32[1,16], index: 2, kind: input, shape index: {}]
  %s3 = inlined_call_operand.vmem [shape: f32[1,16], index: 3, kind: input, shape index: {}]
  %s4 = inlined_call_operand.vmem [shape: bf16[16,32], index: 4, kind: input, shape index: {}]
  %s5 = inlined_call_operand.vmem [shape: f32[1,32], index: 5, kind: input, shape index: {}]
  %s6 = inlined_call_operand.vmem [shape: bf16[32,96], index: 6, kind: input, shape index: {}]
  %s7 = inlined_call_operand.vmem [shape: f32[1,96], index: 7, kind: input, shape index: {}]
  %s8 = inlined_call_operand.vmem [shape: bf16[32,32], index: 8, kind: input, shape index: {}]
  %s9 = inlined_call_operand.vmem [shape: f32[1,32], index: 9, kind: input, shape index: {}]
  %s10 = inlined_call_operand.vmem [shape: f32[1,32], index: 10, kind: input, shape index: {}]
  %s11 = inlined_call_operand.vmem [shape: f32[1,32], index: 11, kind: input, shape index: {}]
  %s12 = inlined_call_operand.vmem [shape: bf16[32,64], index: 12, kind: input, shape index: {}]
  %s13 = inlined_call_operand.vmem [shape: f32[1,64], index: 13, kind: input, shape index: {}]
  %s14 = inlined_call_operand.vmem [shape: bf16[64,32], index: 14, kind: input, shape index: {}]
  %s15 = inlined_call_operand.vmem [shape: f32[1,32], index: 15, kind: input, shape index: {}]
  %s16 = inlined_call_operand.vmem [shape: f32[1,32], index: 16, kind: input, shape index: {}]
  %s17 = inlined_call_operand.vmem [shape: f32[1,32], index: 17, kind: input, shape index: {}]
  %s18 = inlined_call_operand.vmem [shape: bf16[32,32], index: 18, kind: input, shape index: {}]
  %s19 = inlined_call_operand.vmem [shape: f32[1,32], index: 19, kind: input, shape index: {}]
  %s20 = inlined_call_operand.vmem [shape: bf16[32,128], index: 20, kind: input, shape index: {}]
  %s21 = inlined_call_operand.vmem [shape: f32[1,128], index: 21, kind: input, shape index: {}]
  %s22 = inlined_call_operand.vmem [shape: f32[16,128], index: 22, kind: output, shape index: {}]
  %s23 = sld [smem:[#allocation0]]
  $region98: #{news_subject_classifier_forward.1} parent=0
    _
  %s25 = ssub.s32 1, %s23
  %s26 = scalar_select 0, %s25, %s23
  // Predicated region
  $region2: #{news_subject_classifier_forward.1} parent=0 // pred_check
    _
  $region3: #{news_subject_classifier_forward.1} parent=0 // pred_check_branch
    %28 = sbr.rel (0) target = $region5
  $region4: #{news_subject_classifier_forward.1} parent=0 // pred_region
    _
  $region5: #{news_subject_classifier_forward.1} parent=0 // pred_fallthru
    _
  // Predicated region
  $region6: #{news_subject_classifier_forward.1} parent=0 // pred_check
    _
  $region7: #{news_subject_classifier_forward.1} parent=0 // pred_check_branch
    %30 = sbr.rel (0) target = $region9
  $region8: #{news_subject_classifier_forward.1} parent=0 // pred_region
    _
  $region9: #{news_subject_classifier_forward.1} parent=0 // pred_fallthru
    _
  // Predicated region
  $region10: #{news_subject_classifier_forward.1} parent=0 // pred_check
    _
  $region11: #{news_subject_classifier_forward.1} parent=0 // pred_check_branch
    %32 = sbr.rel (0) target = $region13
  $region12: #{news_subject_classifier_forward.1} parent=0 // pred_region
    _
  $region13: #{news_subject_classifier_forward.1} parent=0 // pred_fallthru
    _
  // Predicated region
  $region14: #{news_subject_classifier_forward.1} parent=0 // pred_check
    _
  $region15: #{news_subject_classifier_forward.1} parent=0 // pred_check_branch
    %34 = sbr.rel (0) target = $region17
  $region16: #{news_subject_classifier_forward.1} parent=0 // pred_region
    _
  $region17: #{news_subject_classifier_forward.1} parent=0 // pred_fallthru
    _
  // Predicated region
  $region18: #{news_subject_classifier_forward.1} parent=0 // pred_check
    _
  $region19: #{news_subject_classifier_forward.1} parent=0 // pred_check_branch
    %36 = sbr.rel (0) target = $region21
  $region20: #{news_subject_classifier_forward.1} parent=0 // pred_region
    _
  $region21: #{news_subject_classifier_forward.1} parent=0 // pred_fallthru
    _
  // Predicated region
  $region22: #{news_subject_classifier_forward.1} parent=0 // pred_check
    _
  $region23: #{news_subject_classifier_forward.1} parent=0 // pred_check_branch
    %38 = sbr.rel (0) target = $region25
  $region24: #{news_subject_classifier_forward.1} parent=0 // pred_region
    _
  $region25: #{news_subject_classifier_forward.1} parent=0 // pred_fallthru
    _
  // Predicated region
  $region26: #{news_subject_classifier_forward.1} parent=0 // pred_check
    _
  $region27: #{news_subject_classifier_forward.1} parent=0 // pred_check_branch
    %40 = sbr.rel (0) target = $region29
  $region28: #{news_subject_classifier_forward.1} parent=0 // pred_region
    _
  $region29: #{news_subject_classifier_forward.1} parent=0 // pred_fallthru
    _
  // Predicated region
  $region30: #{news_subject_classifier_forward.1} parent=0 // pred_check
    _
  $region31: #{news_subject_classifier_forward.1} parent=0 // pred_check_branch
    %42 = sbr.rel (0) target = $region33
  $region32: #{news_subject_classifier_forward.1} parent=0 // pred_region
    _
  $region33: #{news_subject_classifier_forward.1} parent=0 // pred_fallthru
    _
  // Predicated region
  $region34: #{news_subject_classifier_forward.1} parent=0 // pred_check
    _
  $region35: #{news_subject_classifier_forward.1} parent=0 // pred_check_branch
    %44 = sbr.rel (0) target = $region37
  $region36: #{news_subject_classifier_forward.1} parent=0 // pred_region
    _
  $region37: #{news_subject_classifier_forward.1} parent=0 // pred_fallthru
    _
  // Predicated region
  $region38: #{news_subject_classifier_forward.1} parent=0 // pred_check
    _
  $region39: #{news_subject_classifier_forward.1} parent=0 // pred_check_branch
    %46 = sbr.rel (0) target = $region41
  $region40: #{news_subject_classifier_forward.1} parent=0 // pred_region
    _
  $region41: #{news_subject_classifier_forward.1} parent=0 // pred_fallthru
    _
  // Predicated region
  $region42: #{news_subject_classifier_forward.1} parent=0 // pred_check
    _
  $region43: #{news_subject_classifier_forward.1} parent=0 // pred_check_branch
    %48 = sbr.rel (0) target = $region45
  $region44: #{news_subject_classifier_forward.1} parent=0 // pred_region
    _
  $region45: #{news_subject_classifier_forward.1} parent=0 // pred_fallthru
    _
  // Predicated region
  $region46: #{news_subject_classifier_forward.1} parent=0 // pred_check
    _
  $region47: #{news_subject_classifier_forward.1} parent=0 // pred_check_branch
    %50 = sbr.rel (0) target = $region49
  $region48: #{news_subject_classifier_forward.1} parent=0 // pred_region
    _
  $region49: #{news_subject_classifier_forward.1} parent=0 // pred_fallthru
    _
  // Predicated region
  $region50: #{news_subject_classifier_forward.1} parent=0 // pred_check
    _
  $region51: #{news_subject_classifier_forward.1} parent=0 // pred_check_branch
    %52 = sbr.rel (0) target = $region53
  $region52: #{news_subject_classifier_forward.1} parent=0 // pred_region
    _
  $region53: #{news_subject_classifier_forward.1} parent=0 // pred_fallthru
    _
  // Predicated region
  $region54: #{news_subject_classifier_forward.1} parent=0 // pred_check
    _
  $region55: #{news_subject_classifier_forward.1} parent=0 // pred_check_branch
    %54 = sbr.rel (0) target = $region57
  $region56: #{news_subject_classifier_forward.1} parent=0 // pred_region
    _
  $region57: #{news_subject_classifier_forward.1} parent=0 // pred_fallthru
    _
  // Predicated region
  $region58: #{news_subject_classifier_forward.1} parent=0 // pred_check
    _
  $region59: #{news_subject_classifier_forward.1} parent=0 // pred_check_branch
    %56 = sbr.rel (0) target = $region61
  $region60: #{news_subject_classifier_forward.1} parent=0 // pred_region
    _
  $region61: #{news_subject_classifier_forward.1} parent=0 // pred_fallthru
    _
  // Predicated region
  $region62: #{news_subject_classifier_forward.1} parent=0 // pred_check
    _
  $region63: #{news_subject_classifier_forward.1} parent=0 // pred_check_branch
    %58 = sbr.rel (0) target = $region65
  $region64: #{news_subject_classifier_forward.1} parent=0 // pred_region
    _
  $region65: #{news_subject_classifier_forward.1} parent=0 // pred_fallthru
    _
  // Predicated region
  $region66: #{news_subject_classifier_forward.1} parent=0 // pred_check
    _
  $region67: #{news_subject_classifier_forward.1} parent=0 // pred_check_branch
    %60 = sbr.rel (0) target = $region69
  $region68: #{news_subject_classifier_forward.1} parent=0 // pred_region
    _
  $region69: #{news_subject_classifier_forward.1} parent=0 // pred_fallthru
    _
  // Predicated region
  $region70: #{news_subject_classifier_forward.1} parent=0 // pred_check
    _
  $region71: #{news_subject_classifier_forward.1} parent=0 // pred_check_branch
    %62 = sbr.rel (0) target = $region73
  $region72: #{news_subject_classifier_forward.1} parent=0 // pred_region
    _
  $region73: #{news_subject_classifier_forward.1} parent=0 // pred_fallthru
    _
  // Predicated region
  $region74: #{news_subject_classifier_forward.1} parent=0 // pred_check
    _
  $region75: #{news_subject_classifier_forward.1} parent=0 // pred_check_branch
    %64 = sbr.rel (0) target = $region77
  $region76: #{news_subject_classifier_forward.1} parent=0 // pred_region
    _
  $region77: #{news_subject_classifier_forward.1} parent=0 // pred_fallthru
    _
  // Predicated region
  $region78: #{news_subject_classifier_forward.1} parent=0 // pred_check
    _
  $region79: #{news_subject_classifier_forward.1} parent=0 // pred_check_branch
    %66 = sbr.rel (0) target = $region81
  $region80: #{news_subject_classifier_forward.1} parent=0 // pred_region
    _
  $region81: #{news_subject_classifier_forward.1} parent=0 // pred_fallthru
    _
  // Predicated region
  $region82: #{news_subject_classifier_forward.1} parent=0 // pred_check
    _
  $region83: #{news_subject_classifier_forward.1} parent=0 // pred_check_branch
    %68 = sbr.rel (0) target = $region85
  $region84: #{news_subject_classifier_forward.1} parent=0 // pred_region
    _
  $region85: #{news_subject_classifier_forward.1} parent=0 // pred_fallthru
    _
  // Predicated region
  $region86: #{news_subject_classifier_forward.1} parent=0 // pred_check
    _
  $region87: #{news_subject_classifier_forward.1} parent=0 // pred_check_branch
    %70 = sbr.rel (0) target = $region89
  $region88: #{news_subject_classifier_forward.1} parent=0 // pred_region
    _
  $region89: #{news_subject_classifier_forward.1} parent=0 // pred_fallthru
    _
  %v72 = vld [vmem:[%s0] sm:$0xff]
  %v73 = vld [vmem:[%s0 + $0x8] sm:$0xff]
  %v74 = vld [vmem:[%s2] sm:$0x1]
  %v75 = vld [vmem:[%s3] sm:$0x1]
  %vm76 = vcmask 130048
  %v77 = vsel %vm76, %v72, 0.0
  %78 = vadd.xlane.f32.xlu0 %v77
  %v79 = vpop.xlane.xlu0 %78
  %v80 = vsel %vm76, %v73, 0.0
  %81 = vadd.xlane.f32.xlu0 %v80
  %v82 = vpop.xlane.xlu0 %81
  %v83 = vrcp.pop 16.0
  %v84 = vmul.f32 16.0, %v83
  %v85 = vsub.f32 1.0, %v84
  %v86 = vmul.f32 %v83, %v85
  %v87 = vadd.f32 %v83, %v86
  %vm88 = vweird.f32 %v83
  %v89 = vsel %vm88, %v83, %v87
  %v90 = vmul.f32 %v79, %v89
  %v91 = vmul.f32 %v82, %v89
  %v92 = vsub.f32 %v72, %v90
  %v93 = vsub.f32 %v73, %v91
  %v94 = vmul.f32 %v92, %v92
  %v95 = vmul.f32 %v93, %v93
  %v96 = vsel %vm76, %v94, 0.0
  %97 = vadd.xlane.f32.xlu0 %v96
  %v98 = vpop.xlane.xlu0 %97
  %v99 = vsel %vm76, %v95, 0.0
  %100 = vadd.xlane.f32.xlu0 %v99
  %v101 = vpop.xlane.xlu0 %100
  %v102 = vmul.f32 %v98, %v89
  %v103 = vmul.f32 %v101, %v89
  %v104 = vadd.f32 %v102, 1e-12
  %v105 = vadd.f32 %v103, 1e-12
  %v106 = vrsqrt.pop %v104
  %v107 = vmul.f32 %v106, %v104
  %v108 = vmul.f32 %v107, %v106
  %v109 = vmul.f32 0.5, %v108
  %v110 = vsub.f32 1.5, %v109
  %v111 = vmul.f32 %v106, %v110
  %vm112 = vweird.f32 %v104
  %vm113 = vweird.f32 %v106
  %vm114 = vmor %vm112, %vm113
  %v115 = vsel %vm114, %v106, %v111
  %v116 = vrsqrt.pop %v105
  %v117 = vmul.f32 %v116, %v105
  %v118 = vmul.f32 %v117, %v116
  %v119 = vmul.f32 0.5, %v118
  %v120 = vsub.f32 1.5, %v119
  %v121 = vmul.f32 %v116, %v120
  %vm122 = vweird.f32 %v105
  %vm123 = vweird.f32 %v116
  %vm124 = vmor %vm122, %vm123
  %v125 = vsel %vm124, %v116, %v121
  %v126 = vmul.f32 %v92, %v115
  %v127 = vmul.f32 %v93, %v125
  %v129 = vperm.slane %v74, 0
  %v131 = vmul.f32 %v126, %v129
  %v132 = vmul.f32 %v127, %v129
  %v134 = vperm.slane %v75, 0
  %v136 = vadd.f32 %v131, %v134
  %v137 = vadd.f32 %v132, %v134
  %v138 = vld [vmem:[%s4] sm:$0xf]
  %v139 = vld [vmem:[%s4 + $0x4] sm:$0xf]
  %v140 = vpack.c.bf16 %v137, %v136
  %v141 = vld [vmem:[%s5] sm:$0x1]
  %v143 = vperm.slane %v141, 0
  %v147 = vunpack.c.l.b16 %v138
  %v148 = vunpack.c.l.b16 %v139
  %v149 = vpack.c.b16 %v148, %v147
  %v152 = vsel %vm76, %v140, 0
  %154 = vmatpush.bf16.msra.mxu0 0
  %155 = vmatpush.bf16.msra.mxu0 0
  %156 = vmatpush.bf16.msra.mxu0 0
  %157 = vmatpush.bf16.msra.mxu0 0
  %158 = vmatpush.bf16.msra.mxu0 0
  %159 = vmatpush.bf16.msra.mxu0 0
  %160 = vmatpush.bf16.msra.mxu0 0
  %161 = vmatpush.bf16.msra.mxu0 %v149
  %162 = vmatmul.bf16.gmra.mxu0 %v152
  %v163 = vpop.f32.mrf.mxu0
  %v164 = vadd.f32 %v143, %v163
  %v165 = vpop.f32.mrf.mxu0
  %v166 = vadd.f32 %v143, %v165
  %167 = vdwg.mxu0
  %vm168 = vcmask 261120
  %169 = vst.msk [vmem:[#allocation2] sm:$0xff] %vm168, %v164
  %170 = vst.msk [vmem:[#allocation2 + $0x8] sm:$0xff] %vm168, %v166
  %v171 = vld [vmem:[%s1] sm:$0xff]
  %v172 = vld [vmem:[%s1 + $0x8] sm:$0xff]
  %v173 = vld [vmem:[#allocation2] sm:$0xff]
  %v174 = vld [vmem:[#allocation2 + $0x8] sm:$0xff]
  %v175 = vld [vmem:[%s6] sm:$0xf]
  %v176 = vld [vmem:[%s6 + $0x4] sm:$0xf]
  %v177 = vld [vmem:[%s6 + $0x8] sm:$0xf]
  %v178 = vld [vmem:[%s6 + $0xc] sm:$0xf]
  %v179 = vpack.c.bf16 %v174, %v173
  %v180 = vld [vmem:[%s7] sm:$0x1]
  %v182 = vperm.slane %v180, 0
  %v188 = vunpack.c.l.b16 %v175
  %v189 = vunpack.c.l.b16 %v176
  %v190 = vunpack.c.l.b16 %v177
  %v191 = vunpack.c.l.b16 %v178
  %v192 = vpack.c.b16 %v189, %v188
  %v193 = vpack.c.b16 %v191, %v190
  %v197 = vsel %vm168, %v179, 0
  %199 = vmatpush.bf16.msra.mxu0 0
  %200 = vmatpush.bf16.msra.mxu0 0
  %201 = vmatpush.bf16.msra.mxu0 0
  %202 = vmatpush.bf16.msra.mxu0 0
  %203 = vmatpush.bf16.msra.mxu0 0
  %204 = vmatpush.bf16.msra.mxu0 0
  %205 = vmatpush.bf16.msra.mxu0 %v193
  %206 = vmatpush.bf16.msra.mxu0 %v192
  %207 = vmatmul.bf16.gmra.mxu0 %v197
  %v208 = vpop.f32.mrf.mxu0
  %v209 = vadd.f32 %v182, %v208
  %v210 = vpop.f32.mrf.mxu0
  %v211 = vadd.f32 %v182, %v210
  %212 = vdwg.mxu0
  %v213 = vpack.c.bf16 %v211, %v209
  %215 = vrot.lane.b32.xlu0 %v213, 96
  %v216 = vpop.permute.xlu0 %215
  %vm217 = vcmask 64512
  %v219 = vsel %vm217, %v213, 0
  %v222 = vsel %vm217, %v216, 0
  %224 = vmatpush.bf16.xpose.msra.mxu0 0
  %225 = vmatpush.bf16.xpose.msra.mxu0 0
  %226 = vmatpush.bf16.xpose.msra.mxu0 0
  %227 = vmatpush.bf16.xpose.msra.mxu0 0
  %228 = vmatpush.bf16.xpose.msra.mxu0 0
  %229 = vmatpush.bf16.xpose.msra.mxu0 0
  %230 = vmatpush.bf16.xpose.msra.mxu0 0
  %231 = vmatpush.bf16.xpose.msra.mxu0 %v222
  %232 = vmatmul.bf16.gmra.mxu0 %v219
  %v233 = vpop.f32.mrf.mxu0
  %v234 = vadd.f32 0.0, %v233
  %v235 = vpop.f32.mrf.mxu0
  %v236 = vadd.f32 0.0, %v235
  %237 = vdwg.mxu0
  %v238 = vmul.f32 %v234, 0.35355338
  %v239 = vmul.f32 %v236, 0.35355338
  %v240 = vadd.f32 %v238, %v171
  %v241 = vadd.f32 %v239, %v172
  %v242 = vsel %vm76, %v240, -inf
  %243 = vmax.xlane.f32.xlu0 %v242
  %v244 = vpop.xlane.xlu0 %243
  %v245 = vsel %vm76, %v241, -inf
  %246 = vmax.xlane.f32.xlu0 %v245
  %v247 = vpop.xlane.xlu0 %246
  %v248 = vsub.f32 %v240, %v244
  %v249 = vsub.f32 %v241, %v247
  %v250 = vmul.f32 %v248, 1.442695
  %v251 = vpow.pop %v250
  %v252 = vmul.f32 %v249, 1.442695
  %v253 = vpow.pop %v252
  %v254 = vsel %vm76, %v251, 0.0
  %255 = vadd.xlane.f32.xlu0 %v254
  %v256 = vpop.xlane.xlu0 %255
  %v257 = vsel %vm76, %v253, 0.0
  %258 = vadd.xlane.f32.xlu0 %v257
  %v259 = vpop.xlane.xlu0 %258
  %v260 = vrcp.pop %v256
  %v261 = vrcp.pop %v259
  %v262 = vmul.f32 %v251, %v260
  %v263 = vmul.f32 %v253, %v261
  %v264 = vpack.c.bf16 %v263, %v262
  %265 = vrot.lane.b32.xlu0 %v213, 64
  %v266 = vpop.permute.xlu0 %265
  %v269 = vsel %vm76, %v264, 0
  %271 = vmatpush.bf16.msra.mxu0 0
  %272 = vmatpush.bf16.msra.mxu0 0
  %273 = vmatpush.bf16.msra.mxu0 0
  %274 = vmatpush.bf16.msra.mxu0 0
  %275 = vmatpush.bf16.msra.mxu0 0
  %276 = vmatpush.bf16.msra.mxu0 0
  %277 = vmatpush.bf16.msra.mxu0 0
  %278 = vmatpush.bf16.msra.mxu0 %v266
  %279 = vmatmul.bf16.gmra.mxu0 %v269
  %v280 = vpop.f32.mrf.mxu0
  %v281 = vadd.f32 0.0, %v280
  %v282 = vpop.f32.mrf.mxu0
  %v283 = vadd.f32 0.0, %v282
  %284 = vdwg.mxu0
  %285 = vst.msk [vmem:[#allocation3] sm:$0xff] %vm217, %v281
  %286 = vst.msk [vmem:[#allocation3 + $0x8] sm:$0xff] %vm217, %v283
  %287 = vrot.lane.b32.xlu0 %v213, 120
  %v288 = vpop.permute.xlu0 %287
  %289 = vrot.lane.b32.xlu0 %v213, 88
  %v290 = vpop.permute.xlu0 %289
  %v292 = vsel %vm217, %v288, 0
  %v295 = vsel %vm217, %v290, 0
  %297 = vmatpush.bf16.xpose.msra.mxu0 0
  %298 = vmatpush.bf16.xpose.msra.mxu0 0
  %299 = vmatpush.bf16.xpose.msra.mxu0 0
  %300 = vmatpush.bf16.xpose.msra.mxu0 0
  %301 = vmatpush.bf16.xpose.msra.mxu0 0
  %302 = vmatpush.bf16.xpose.msra.mxu0 0
  %303 = vmatpush.bf16.xpose.msra.mxu0 0
  %304 = vmatpush.bf16.xpose.msra.mxu0 %v295
  %305 = vmatmul.bf16.gmra.mxu0 %v292
  %v306 = vpop.f32.mrf.mxu0
  %v307 = vadd.f32 0.0, %v306
  %v308 = vpop.f32.mrf.mxu0
  %v309 = vadd.f32 0.0, %v308
  %310 = vdwg.mxu0
  %v311 = vmul.f32 %v307, 0.35355338
  %v312 = vmul.f32 %v309, 0.35355338
  %v313 = vadd.f32 %v311, %v171
  %v314 = vadd.f32 %v312, %v172
  %v315 = vsel %vm76, %v313, -inf
  %316 = vmax.xlane.f32.xlu0 %v315
  %v317 = vpop.xlane.xlu0 %316
  %v318 = vsel %vm76, %v314, -inf
  %319 = vmax.xlane.f32.xlu0 %v318
  %v320 = vpop.xlane.xlu0 %319
  %v321 = vsub.f32 %v313, %v317
  %v322 = vsub.f32 %v314, %v320
  %v323 = vmul.f32 %v321, 1.442695
  %v324 = vpow.pop %v323
  %v325 = vmul.f32 %v322, 1.442695
  %v326 = vpow.pop %v325
  %v327 = vsel %vm76, %v324, 0.0
  %328 = vadd.xlane.f32.xlu0 %v327
  %v329 = vpop.xlane.xlu0 %328
  %v330 = vsel %vm76, %v326, 0.0
  %331 = vadd.xlane.f32.xlu0 %v330
  %v332 = vpop.xlane.xlu0 %331
  %v333 = vrcp.pop %v329
  %v334 = vrcp.pop %v332
  %v335 = vmul.f32 %v324, %v333
  %v336 = vmul.f32 %v326, %v334
  %v337 = vpack.c.bf16 %v336, %v335
  %338 = vrot.lane.b32.xlu0 %v213, 56
  %v339 = vpop.permute.xlu0 %338
  %v342 = vsel %vm76, %v337, 0
  %344 = vmatpush.bf16.msra.mxu0 0
  %345 = vmatpush.bf16.msra.mxu0 0
  %346 = vmatpush.bf16.msra.mxu0 0
  %347 = vmatpush.bf16.msra.mxu0 0
  %348 = vmatpush.bf16.msra.mxu0 0
  %349 = vmatpush.bf16.msra.mxu0 0
  %350 = vmatpush.bf16.msra.mxu0 0
  %351 = vmatpush.bf16.msra.mxu0 %v339
  %352 = vmatmul.bf16.gmra.mxu0 %v342
  %v353 = vpop.f32.mrf.mxu0
  %v354 = vadd.f32 0.0, %v353
  %v355 = vpop.f32.mrf.mxu0
  %v356 = vadd.f32 0.0, %v355
  %357 = vdwg.mxu0
  %360 = vrot.lane.b32.xlu0 %v354, 8
  %v361 = vpop.permute.xlu0 %360
  %362 = vrot.lane.b32.xlu0 %v356, 8
  %v363 = vpop.permute.xlu0 %362
  %vm366 = vcmask 130112
  %367 = vst.msk [vmem:[#allocation3] sm:$0xff] %vm366, %v361
  %368 = vst.msk [vmem:[#allocation3 + $0x8] sm:$0xff] %vm366, %v363
  %369 = vrot.lane.b32.xlu0 %v213, 112
  %v370 = vpop.permute.xlu0 %369
  %371 = vrot.lane.b32.xlu0 %v213, 80
  %v372 = vpop.permute.xlu0 %371
  %v374 = vsel %vm217, %v370, 0
  %v377 = vsel %vm217, %v372, 0
  %379 = vmatpush.bf16.xpose.msra.mxu0 0
  %380 = vmatpush.bf16.xpose.msra.mxu0 0
  %381 = vmatpush.bf16.xpose.msra.mxu0 0
  %382 = vmatpush.bf16.xpose.msra.mxu0 0
  %383 = vmatpush.bf16.xpose.msra.mxu0 0
  %384 = vmatpush.bf16.xpose.msra.mxu0 0
  %385 = vmatpush.bf16.xpose.msra.mxu0 0
  %386 = vmatpush.bf16.xpose.msra.mxu0 %v377
  %387 = vmatmul.bf16.gmra.mxu0 %v374
  %v388 = vpop.f32.mrf.mxu0
  %v389 = vadd.f32 0.0, %v388
  %v390 = vpop.f32.mrf.mxu0
  %v391 = vadd.f32 0.0, %v390
  %392 = vdwg.mxu0
  %v393 = vmul.f32 %v389, 0.35355338
  %v394 = vmul.f32 %v391, 0.35355338
  %v395 = vadd.f32 %v393, %v171
  %v396 = vadd.f32 %v394, %v172
  %v397 = vsel %vm76, %v395, -inf
  %398 = vmax.xlane.f32.xlu0 %v397
  %v399 = vpop.xlane.xlu0 %398
  %v400 = vsel %vm76, %v396, -inf
  %401 = vmax.xlane.f32.xlu0 %v400
  %v402 = vpop.xlane.xlu0 %401
  %v403 = vsub.f32 %v395, %v399
  %v404 = vsub.f32 %v396, %v402
  %v405 = vmul.f32 %v403, 1.442695
  %v406 = vpow.pop %v405
  %v407 = vmul.f32 %v404, 1.442695
  %v408 = vpow.pop %v407
  %v409 = vsel %vm76, %v406, 0.0
  %410 = vadd.xlane.f32.xlu0 %v409
  %v411 = vpop.xlane.xlu0 %410
  %v412 = vsel %vm76, %v408, 0.0
  %413 = vadd.xlane.f32.xlu0 %v412
  %v414 = vpop.xlane.xlu0 %413
  %v415 = vrcp.pop %v411
  %v416 = vrcp.pop %v414
  %v417 = vmul.f32 %v406, %v415
  %v418 = vmul.f32 %v408, %v416
  %v419 = vpack.c.bf16 %v418, %v417
  %420 = vrot.lane.b32.xlu0 %v213, 48
  %v421 = vpop.permute.xlu0 %420
  %v424 = vsel %vm76, %v419, 0
  %426 = vmatpush.bf16.msra.mxu0 0
  %427 = vmatpush.bf16.msra.mxu0 0
  %428 = vmatpush.bf16.msra.mxu0 0
  %429 = vmatpush.bf16.msra.mxu0 0
  %430 = vmatpush.bf16.msra.mxu0 0
  %431 = vmatpush.bf16.msra.mxu0 0
  %432 = vmatpush.bf16.msra.mxu0 0
  %433 = vmatpush.bf16.msra.mxu0 %v421
  %434 = vmatmul.bf16.gmra.mxu0 %v424
  %v435 = vpop.f32.mrf.mxu0
  %v436 = vadd.f32 0.0, %v435
  %v437 = vpop.f32.mrf.mxu0
  %v438 = vadd.f32 0.0, %v437
  %439 = vdwg.mxu0
  %442 = vrot.lane.b32.xlu0 %v436, 16
  %v443 = vpop.permute.xlu0 %442
  %444 = vrot.lane.b32.xlu0 %v438, 16
  %v445 = vpop.permute.xlu0 %444
  %vm448 = vcmask 195712
  %449 = vst.msk [vmem:[#allocation3] sm:$0xff] %vm448, %v443
  %450 = vst.msk [vmem:[#allocation3 + $0x8] sm:$0xff] %vm448, %v445
  %451 = vrot.lane.b32.xlu0 %v213, 104
  %v452 = vpop.permute.xlu0 %451
  %453 = vrot.lane.b32.xlu0 %v213, 72
  %v454 = vpop.permute.xlu0 %453
  %v456 = vsel %vm217, %v452, 0
  %v459 = vsel %vm217, %v454, 0
  %461 = vmatpush.bf16.xpose.msra.mxu0 0
  %462 = vmatpush.bf16.xpose.msra.mxu0 0
  %463 = vmatpush.bf16.xpose.msra.mxu0 0
  %464 = vmatpush.bf16.xpose.msra.mxu0 0
  %465 = vmatpush.bf16.xpose.msra.mxu0 0
  %466 = vmatpush.bf16.xpose.msra.mxu0 0
  %467 = vmatpush.bf16.xpose.msra.mxu0 0
  %468 = vmatpush.bf16.xpose.msra.mxu0 %v459
  %469 = vmatmul.bf16.gmra.mxu0 %v456
  %v470 = vpop.f32.mrf.mxu0
  %v471 = vadd.f32 0.0, %v470
  %v472 = vpop.f32.mrf.mxu0
  %v473 = vadd.f32 0.0, %v472
  %474 = vdwg.mxu0
  %v475 = vmul.f32 %v471, 0.35355338
  %v476 = vmul.f32 %v473, 0.35355338
  %v477 = vadd.f32 %v475, %v171
  %v478 = vadd.f32 %v476, %v172
  %v479 = vsel %vm76, %v477, -inf
  %480 = vmax.xlane.f32.xlu0 %v479
  %v481 = vpop.xlane.xlu0 %480
  %v482 = vsel %vm76, %v478, -inf
  %483 = vmax.xlane.f32.xlu0 %v482
  %v484 = vpop.xlane.xlu0 %483
  %v485 = vsub.f32 %v477, %v481
  %v486 = vsub.f32 %v478, %v484
  %v487 = vmul.f32 %v485, 1.442695
  %v488 = vpow.pop %v487
  %v489 = vmul.f32 %v486, 1.442695
  %v490 = vpow.pop %v489
  %v491 = vsel %vm76, %v488, 0.0
  %492 = vadd.xlane.f32.xlu0 %v491
  %v493 = vpop.xlane.xlu0 %492
  %v494 = vsel %vm76, %v490, 0.0
  %495 = vadd.xlane.f32.xlu0 %v494
  %v496 = vpop.xlane.xlu0 %495
  %v497 = vrcp.pop %v493
  %v498 = vrcp.pop %v496
  %v499 = vmul.f32 %v488, %v497
  %v500 = vmul.f32 %v490, %v498
  %v501 = vpack.c.bf16 %v500, %v499
  %502 = vrot.lane.b32.xlu0 %v213, 40
  %v503 = vpop.permute.xlu0 %502
  %v506 = vsel %vm76, %v501, 0
  %508 = vmatpush.bf16.msra.mxu0 0
  %509 = vmatpush.bf16.msra.mxu0 0
  %510 = vmatpush.bf16.msra.mxu0 0
  %511 = vmatpush.bf16.msra.mxu0 0
  %512 = vmatpush.bf16.msra.mxu0 0
  %513 = vmatpush.bf16.msra.mxu0 0
  %514 = vmatpush.bf16.msra.mxu0 0
  %515 = vmatpush.bf16.msra.mxu0 %v503
  %516 = vmatmul.bf16.gmra.mxu0 %v506
  %v517 = vpop.f32.mrf.mxu0
  %v518 = vadd.f32 0.0, %v517
  %v519 = vpop.f32.mrf.mxu0
  %v520 = vadd.f32 0.0, %v519
  %521 = vdwg.mxu0
  %524 = vrot.lane.b32.xlu0 %v518, 24
  %v525 = vpop.permute.xlu0 %524
  %526 = vrot.lane.b32.xlu0 %v520, 24
  %v527 = vpop.permute.xlu0 %526
  %vm530 = vcmask 261312
  %531 = vst.msk [vmem:[#allocation3] sm:$0xff] %vm530, %v525
  %532 = vst.msk [vmem:[#allocation3 + $0x8] sm:$0xff] %vm530, %v527
  %v533 = vld [vmem:[#allocation3] sm:$0xff]
  %v534 = vld [vmem:[#allocation3 + $0x8] sm:$0xff]
  %v535 = vld [vmem:[%s8] sm:$0xf]
  %v536 = vld [vmem:[%s8 + $0x4] sm:$0xf]
  %v537 = vld [vmem:[%s8 + $0x8] sm:$0xf]
  %v538 = vld [vmem:[%s8 + $0xc] sm:$0xf]
  %v539 = vpack.c.bf16 %v534, %v533
  %v540 = vld [vmem:[%s9] sm:$0x1]
  %v542 = vperm.slane %v540, 0
  %v548 = vunpack.c.l.b16 %v535
  %v549 = vunpack.c.l.b16 %v536
  %v550 = vunpack.c.l.b16 %v537
  %v551 = vunpack.c.l.b16 %v538
  %v552 = vpack.c.b16 %v549, %v548
  %v553 = vpack.c.b16 %v551, %v550
  %v557 = vsel %vm168, %v539, 0
  %559 = vmatpush.bf16.msra.mxu0 0
  %560 = vmatpush.bf16.msra.mxu0 0
  %561 = vmatpush.bf16.msra.mxu0 0
  %562 = vmatpush.bf16.msra.mxu0 0
  %563 = vmatpush.bf16.msra.mxu0 0
  %564 = vmatpush.bf16.msra.mxu0 0
  %565 = vmatpush.bf16.msra.mxu0 %v553
  %566 = vmatpush.bf16.msra.mxu0 %v552
  %567 = vmatmul.bf16.gmra.mxu0 %v557
  %v568 = vpop.f32.mrf.mxu0
  %v569 = vadd.f32 %v542, %v568
  %v570 = vpop.f32.mrf.mxu0
  %v571 = vadd.f32 %v542, %v570
  %572 = vdwg.mxu0
  %v573 = vadd.f32 %v173, %v569
  %v574 = vadd.f32 %v174, %v571
  %v575 = vld [vmem:[%s10] sm:$0x1]
  %v576 = vld [vmem:[%s11] sm:$0x1]
  %v577 = vsel %vm168, %v573, 0.0
  %578 = vadd.xlane.f32.xlu0 %v577
  %v579 = vpop.xlane.xlu0 %578
  %v580 = vsel %vm168, %v574, 0.0
  %581 = vadd.xlane.f32.xlu0 %v580
  %v582 = vpop.xlane.xlu0 %581
  %v583 = vrcp.pop 32.0
  %v584 = vmul.f32 32.0, %v583
  %v585 = vsub.f32 1.0, %v584
  %v586 = vmul.f32 %v583, %v585
  %v587 = vadd.f32 %v583, %v586
  %vm588 = vweird.f32 %v583
  %v589 = vsel %vm588, %v583, %v587
  %v590 = vmul.f32 %v579, %v589
  %v591 = vmul.f32 %v582, %v589
  %v592 = vsub.f32 %v573, %v590
  %v593 = vsub.f32 %v574, %v591
  %v594 = vmul.f32 %v592, %v592
  %v595 = vmul.f32 %v593, %v593
  %v596 = vsel %vm168, %v594, 0.0
  %597 = vadd.xlane.f32.xlu0 %v596
  %v598 = vpop.xlane.xlu0 %597
  %v599 = vsel %vm168, %v595, 0.0
  %600 = vadd.xlane.f32.xlu0 %v599
  %v601 = vpop.xlane.xlu0 %600
  %v602 = vmul.f32 %v598, %v589
  %v603 = vmul.f32 %v601, %v589
  %v604 = vadd.f32 %v602, 1e-12
  %v605 = vadd.f32 %v603, 1e-12
  %v606 = vrsqrt.pop %v604
  %v607 = vmul.f32 %v606, %v604
  %v608 = vmul.f32 %v607, %v606
  %v609 = vmul.f32 0.5, %v608
  %v610 = vsub.f32 1.5, %v609
  %v611 = vmul.f32 %v606, %v610
  %vm612 = vweird.f32 %v604
  %vm613 = vweird.f32 %v606
  %vm614 = vmor %vm612, %vm613
  %v615 = vsel %vm614, %v606, %v611
  %v616 = vrsqrt.pop %v605
  %v617 = vmul.f32 %v616, %v605
  %v618 = vmul.f32 %v617, %v616
  %v619 = vmul.f32 0.5, %v618
  %v620 = vsub.f32 1.5, %v619
  %v621 = vmul.f32 %v616, %v620
  %vm622 = vweird.f32 %v605
  %vm623 = vweird.f32 %v616
  %vm624 = vmor %vm622, %vm623
  %v625 = vsel %vm624, %v616, %v621
  %v626 = vmul.f32 %v592, %v615
  %v627 = vmul.f32 %v593, %v625
  %v629 = vperm.slane %v575, 0
  %v631 = vmul.f32 %v626, %v629
  %v632 = vmul.f32 %v627, %v629
  %v634 = vperm.slane %v576, 0
  %v636 = vadd.f32 %v631, %v634
  %v637 = vadd.f32 %v632, %v634
  %v638 = vld [vmem:[%s12] sm:$0xf]
  %v639 = vld [vmem:[%s12 + $0x4] sm:$0xf]
  %v640 = vld [vmem:[%s12 + $0x8] sm:$0xf]
  %v641 = vld [vmem:[%s12 + $0xc] sm:$0xf]
  %v642 = vpack.c.bf16 %v637, %v636
  %v643 = vld [vmem:[%s13] sm:$0x1]
  %v645 = vperm.slane %v643, 0
  %v651 = vunpack.c.l.b16 %v638
  %v652 = vunpack.c.l.b16 %v639
  %v653 = vunpack.c.l.b16 %v640
  %v654 = vunpack.c.l.b16 %v641
  %v655 = vpack.c.b16 %v652, %v651
  %v656 = vpack.c.b16 %v654, %v653
  %v660 = vsel %vm168, %v642, 0
  %662 = vmatpush.bf16.msra.mxu0 0
  %663 = vmatpush.bf16.msra.mxu0 0
  %664 = vmatpush.bf16.msra.mxu0 0
  %665 = vmatpush.bf16.msra.mxu0 0
  %666 = vmatpush.bf16.msra.mxu0 0
  %667 = vmatpush.bf16.msra.mxu0 0
  %668 = vmatpush.bf16.msra.mxu0 %v656
  %669 = vmatpush.bf16.msra.mxu0 %v655
  %670 = vmatmul.bf16.gmra.mxu0 %v660
  %v671 = vpop.f32.mrf.mxu0
  %v672 = vadd.f32 %v645, %v671
  %v673 = vpop.f32.mrf.mxu0
  %v674 = vadd.f32 %v645, %v673
  %675 = vdwg.mxu0
  %v676 = vmul.f32 %v672, %v672
  %v677 = vmul.f32 %v674, %v674
  %v678 = vmul.f32 %v672, %v676
  %v679 = vmul.f32 %v674, %v677
  %v680 = vmul.f32 %v678, 0.044715
  %v681 = vmul.f32 %v679, 0.044715
  %v682 = vadd.f32 %v672, %v680
  %v683 = vadd.f32 %v674, %v681
  %v684 = vmul.f32 %v682, 0.7978846
  %v685 = vmul.f32 %v683, 0.7978846
  %v686 = vtanh.pop %v684
  %v687 = vtanh.pop %v685
  %v688 = vadd.f32 %v686, 1.0
  %v689 = vadd.f32 %v687, 1.0
  %v690 = vmul.f32 %v688, 0.5
  %v691 = vmul.f32 %v689, 0.5
  %v692 = vmul.f32 %v672, %v690
  %v693 = vmul.f32 %v674, %v691
  %v694 = vld [vmem:[%s14] sm:$0xf]
  %v695 = vld [vmem:[%s14 + $0x4] sm:$0xf]
  %v696 = vld [vmem:[%s14 + $0x8] sm:$0xf]
  %v697 = vld [vmem:[%s14 + $0xc] sm:$0xf]
  %v698 = vld [vmem:[%s14 + $0x10] sm:$0xf]
  %v699 = vld [vmem:[%s14 + $0x14] sm:$0xf]
  %v700 = vld [vmem:[%s14 + $0x18] sm:$0xf]
  %v701 = vld [vmem:[%s14 + $0x1c] sm:$0xf]
  %v702 = vpack.c.bf16 %v693, %v692
  %v703 = vld [vmem:[%s15] sm:$0x1]
  %v705 = vperm.slane %v703, 0
  %v715 = vunpack.c.l.b16 %v694
  %v716 = vunpack.c.l.b16 %v695
  %v717 = vunpack.c.l.b16 %v696
  %v718 = vunpack.c.l.b16 %v697
  %v719 = vunpack.c.l.b16 %v698
  %v720 = vunpack.c.l.b16 %v699
  %v721 = vunpack.c.l.b16 %v700
  %v722 = vunpack.c.l.b16 %v701
  %v723 = vpack.c.b16 %v716, %v715
  %v724 = vpack.c.b16 %v718, %v717
  %v725 = vpack.c.b16 %v720, %v719
  %v726 = vpack.c.b16 %v722, %v721
  %vm731 = vcmask 523264
  %v733 = vsel %vm731, %v702, 0
  %735 = vmatpush.bf16.msra.mxu0 0
  %736 = vmatpush.bf16.msra.mxu0 0
  %737 = vmatpush.bf16.msra.mxu0 0
  %738 = vmatpush.bf16.msra.mxu0 0
  %739 = vmatpush.bf16.msra.mxu0 %v726
  %740 = vmatpush.bf16.msra.mxu0 %v725
  %741 = vmatpush.bf16.msra.mxu0 %v724
  %742 = vmatpush.bf16.msra.mxu0 %v723
  %743 = vmatmul.bf16.gmra.mxu0 %v733
  %v744 = vpop.f32.mrf.mxu0
  %v745 = vadd.f32 %v705, %v744
  %v746 = vpop.f32.mrf.mxu0
  %v747 = vadd.f32 %v705, %v746
  %748 = vdwg.mxu0
  %v749 = vadd.f32 %v636, %v745
  %v750 = vadd.f32 %v637, %v747
  %v751 = vld [vmem:[%s16] sm:$0x1]
  %v752 = vld [vmem:[%s17] sm:$0x1]
  %v753 = vsel %vm168, %v749, 0.0
  %754 = vadd.xlane.f32.xlu0 %v753
  %v755 = vpop.xlane.xlu0 %754
  %v756 = vsel %vm168, %v750, 0.0
  %757 = vadd.xlane.f32.xlu0 %v756
  %v758 = vpop.xlane.xlu0 %757
  %v759 = vmul.f32 %v755, %v589
  %v760 = vmul.f32 %v758, %v589
  %v761 = vsub.f32 %v749, %v759
  %v762 = vsub.f32 %v750, %v760
  %v763 = vmul.f32 %v761, %v761
  %v764 = vmul.f32 %v762, %v762
  %v765 = vsel %vm168, %v763, 0.0
  %766 = vadd.xlane.f32.xlu0 %v765
  %v767 = vpop.xlane.xlu0 %766
  %v768 = vsel %vm168, %v764, 0.0
  %769 = vadd.xlane.f32.xlu0 %v768
  %v770 = vpop.xlane.xlu0 %769
  %v771 = vmul.f32 %v767, %v589
  %v772 = vmul.f32 %v770, %v589
  %v773 = vadd.f32 %v771, 1e-12
  %v774 = vadd.f32 %v772, 1e-12
  %v775 = vrsqrt.pop %v773
  %v776 = vmul.f32 %v775, %v773
  %v777 = vmul.f32 %v776, %v775
  %v778 = vmul.f32 0.5, %v777
  %v779 = vsub.f32 1.5, %v778
  %v780 = vmul.f32 %v775, %v779
  %vm781 = vweird.f32 %v773
  %vm782 = vweird.f32 %v775
  %vm783 = vmor %vm781, %vm782
  %v784 = vsel %vm783, %v775, %v780
  %v785 = vrsqrt.pop %v774
  %v786 = vmul.f32 %v785, %v774
  %v787 = vmul.f32 %v786, %v785
  %v788 = vmul.f32 0.5, %v787
  %v789 = vsub.f32 1.5, %v788
  %v790 = vmul.f32 %v785, %v789
  %vm791 = vweird.f32 %v774
  %vm792 = vweird.f32 %v785
  %vm793 = vmor %vm791, %vm792
  %v794 = vsel %vm793, %v785, %v790
  %v795 = vmul.f32 %v761, %v784
  %v796 = vmul.f32 %v762, %v794
  %v798 = vperm.slane %v751, 0
  %v800 = vmul.f32 %v795, %v798
  %v801 = vmul.f32 %v796, %v798
  %v803 = vperm.slane %v752, 0
  %v805 = vadd.f32 %v800, %v803
  %v806 = vadd.f32 %v801, %v803
  %807 = vst.msk [vmem:[#allocation2] sm:$0xff] %vm168, %v805
  %808 = vst.msk [vmem:[#allocation2 + $0x8] sm:$0xff] %vm168, %v806
  %v809 = vld [vmem:[#allocation2] sm:$0xff]
  %v810 = vld [vmem:[#allocation2 + $0x8] sm:$0xff]
  %v811 = vld [vmem:[%s6] sm:$0xf]
  %v812 = vld [vmem:[%s6 + $0x4] sm:$0xf]
  %v813 = vld [vmem:[%s6 + $0x8] sm:$0xf]
  %v814 = vld [vmem:[%s6 + $0xc] sm:$0xf]
  %v815 = vpack.c.bf16 %v810, %v809
  %v816 = vld [vmem:[%s7] sm:$0x1]
  %v818 = vperm.slane %v816, 0
  %v824 = vunpack.c.l.b16 %v811
  %v825 = vunpack.c.l.b16 %v812
  %v826 = vunpack.c.l.b16 %v813
  %v827 = vunpack.c.l.b16 %v814
  %v828 = vpack.c.b16 %v825, %v824
  %v829 = vpack.c.b16 %v827, %v826
  %v833 = vsel %vm168, %v815, 0
  %835 = vmatpush.bf16.msra.mxu0 0
  %836 = vmatpush.bf16.msra.mxu0 0
  %837 = vmatpush.bf16.msra.mxu0 0
  %838 = vmatpush.bf16.msra.mxu0 0
  %839 = vmatpush.bf16.msra.mxu0 0
  %840 = vmatpush.bf16.msra.mxu0 0
  %841 = vmatpush.bf16.msra.mxu0 %v829
  %842 = vmatpush.bf16.msra.mxu0 %v828
  %843 = vmatmul.bf16.gmra.mxu0 %v833
  %v844 = vpop.f32.mrf.mxu0
  %v845 = vadd.f32 %v818, %v844
  %v846 = vpop.f32.mrf.mxu0
  %v847 = vadd.f32 %v818, %v846
  %848 = vdwg.mxu0
  %v849 = vpack.c.bf16 %v847, %v845
  %851 = vrot.lane.b32.xlu0 %v849, 96
  %v852 = vpop.permute.xlu0 %851
  %v854 = vsel %vm217, %v849, 0
  %v857 = vsel %vm217, %v852, 0
  %859 = vmatpush.bf16.xpose.msra.mxu0 0
  %860 = vmatpush.bf16.xpose.msra.mxu0 0
  %861 = vmatpush.bf16.xpose.msra.mxu0 0
  %862 = vmatpush.bf16.xpose.msra.mxu0 0
  %863 = vmatpush.bf16.xpose.msra.mxu0 0
  %864 = vmatpush.bf16.xpose.msra.mxu0 0
  %865 = vmatpush.bf16.xpose.msra.mxu0 0
  %866 = vmatpush.bf16.xpose.msra.mxu0 %v857
  %867 = vmatmul.bf16.gmra.mxu0 %v854
  %v868 = vpop.f32.mrf.mxu0
  %v869 = vadd.f32 0.0, %v868
  %v870 = vpop.f32.mrf.mxu0
  %v871 = vadd.f32 0.0, %v870
  %872 = vdwg.mxu0
  %v873 = vmul.f32 %v869, 0.35355338
  %v874 = vmul.f32 %v871, 0.35355338
  %v875 = vadd.f32 %v873, %v171
  %v876 = vadd.f32 %v874, %v172
  %v877 = vsel %vm76, %v875, -inf
  %878 = vmax.xlane.f32.xlu0 %v877
  %v879 = vpop.xlane.xlu0 %878
  %v880 = vsel %vm76, %v876, -inf
  %881 = vmax.xlane.f32.xlu0 %v880
  %v882 = vpop.xlane.xlu0 %881
  %v883 = vsub.f32 %v875, %v879
  %v884 = vsub.f32 %v876, %v882
  %v885 = vmul.f32 %v883, 1.442695
  %v886 = vpow.pop %v885
  %v887 = vmul.f32 %v884, 1.442695
  %v888 = vpow.pop %v887
  %v889 = vsel %vm76, %v886, 0.0
  %890 = vadd.xlane.f32.xlu0 %v889
  %v891 = vpop.xlane.xlu0 %890
  %v892 = vsel %vm76, %v888, 0.0
  %893 = vadd.xlane.f32.xlu0 %v892
  %v894 = vpop.xlane.xlu0 %893
  %v895 = vrcp.pop %v891
  %v896 = vrcp.pop %v894
  %v897 = vmul.f32 %v886, %v895
  %v898 = vmul.f32 %v888, %v896
  %v899 = vpack.c.bf16 %v898, %v897
  %900 = vrot.lane.b32.xlu0 %v849, 64
  %v901 = vpop.permute.xlu0 %900
  %v904 = vsel %vm76, %v899, 0
  %906 = vmatpush.bf16.msra.mxu0 0
  %907 = vmatpush.bf16.msra.mxu0 0
  %908 = vmatpush.bf16.msra.mxu0 0
  %909 = vmatpush.bf16.msra.mxu0 0
  %910 = vmatpush.bf16.msra.mxu0 0
  %911 = vmatpush.bf16.msra.mxu0 0
  %912 = vmatpush.bf16.msra.mxu0 0
  %913 = vmatpush.bf16.msra.mxu0 %v901
  %914 = vmatmul.bf16.gmra.mxu0 %v904
  %v915 = vpop.f32.mrf.mxu0
  %v916 = vadd.f32 0.0, %v915
  %v917 = vpop.f32.mrf.mxu0
  %v918 = vadd.f32 0.0, %v917
  %919 = vdwg.mxu0
  %920 = vst.msk [vmem:[#allocation3] sm:$0xff] %vm217, %v916
  %921 = vst.msk [vmem:[#allocation3 + $0x8] sm:$0xff] %vm217, %v918
  %922 = vrot.lane.b32.xlu0 %v849, 120
  %v923 = vpop.permute.xlu0 %922
  %924 = vrot.lane.b32.xlu0 %v849, 88
  %v925 = vpop.permute.xlu0 %924
  %v927 = vsel %vm217, %v923, 0
  %v930 = vsel %vm217, %v925, 0
  %932 = vmatpush.bf16.xpose.msra.mxu0 0
  %933 = vmatpush.bf16.xpose.msra.mxu0 0
  %934 = vmatpush.bf16.xpose.msra.mxu0 0
  %935 = vmatpush.bf16.xpose.msra.mxu0 0
  %936 = vmatpush.bf16.xpose.msra.mxu0 0
  %937 = vmatpush.bf16.xpose.msra.mxu0 0
  %938 = vmatpush.bf16.xpose.msra.mxu0 0
  %939 = vmatpush.bf16.xpose.msra.mxu0 %v930
  %940 = vmatmul.bf16.gmra.mxu0 %v927
  %v941 = vpop.f32.mrf.mxu0
  %v942 = vadd.f32 0.0, %v941
  %v943 = vpop.f32.mrf.mxu0
  %v944 = vadd.f32 0.0, %v943
  %945 = vdwg.mxu0
  %v946 = vmul.f32 %v942, 0.35355338
  %v947 = vmul.f32 %v944, 0.35355338
  %v948 = vadd.f32 %v946, %v171
  %v949 = vadd.f32 %v947, %v172
  %v950 = vsel %vm76, %v948, -inf
  %951 = vmax.xlane.f32.xlu0 %v950
  %v952 = vpop.xlane.xlu0 %951
  %v953 = vsel %vm76, %v949, -inf
  %954 = vmax.xlane.f32.xlu0 %v953
  %v955 = vpop.xlane.xlu0 %954
  %v956 = vsub.f32 %v948, %v952
  %v957 = vsub.f32 %v949, %v955
  %v958 = vmul.f32 %v956, 1.442695
  %v959 = vpow.pop %v958
  %v960 = vmul.f32 %v957, 1.442695
  %v961 = vpow.pop %v960
  %v962 = vsel %vm76, %v959, 0.0
  %963 = vadd.xlane.f32.xlu0 %v962
  %v964 = vpop.xlane.xlu0 %963
  %v965 = vsel %vm76, %v961, 0.0
  %966 = vadd.xlane.f32.xlu0 %v965
  %v967 = vpop.xlane.xlu0 %966
  %v968 = vrcp.pop %v964
  %v969 = vrcp.pop %v967
  %v970 = vmul.f32 %v959, %v968
  %v971 = vmul.f32 %v961, %v969
  %v972 = vpack.c.bf16 %v971, %v970
  %973 = vrot.lane.b32.xlu0 %v849, 56
  %v974 = vpop.permute.xlu0 %973
  %v977 = vsel %vm76, %v972, 0
  %979 = vmatpush.bf16.msra.mxu0 0
  %980 = vmatpush.bf16.msra.mxu0 0
  %981 = vmatpush.bf16.msra.mxu0 0
  %982 = vmatpush.bf16.msra.mxu0 0
  %983 = vmatpush.bf16.msra.mxu0 0
  %984 = vmatpush.bf16.msra.mxu0 0
  %985 = vmatpush.bf16.msra.mxu0 0
  %986 = vmatpush.bf16.msra.mxu0 %v974
  %987 = vmatmul.bf16.gmra.mxu0 %v977
  %v988 = vpop.f32.mrf.mxu0
  %v989 = vadd.f32 0.0, %v988
  %v990 = vpop.f32.mrf.mxu0
  %v991 = vadd.f32 0.0, %v990
  %992 = vdwg.mxu0
  %995 = vrot.lane.b32.xlu0 %v989, 8
  %v996 = vpop.permute.xlu0 %995
  %997 = vrot.lane.b32.xlu0 %v991, 8
  %v998 = vpop.permute.xlu0 %997
  %1001 = vst.msk [vmem:[#allocation3] sm:$0xff] %vm366, %v996
  %1002 = vst.msk [vmem:[#allocation3 + $0x8] sm:$0xff] %vm366, %v998
  %1003 = vrot.lane.b32.xlu0 %v849, 112
  %v1004 = vpop.permute.xlu0 %1003
  %1005 = vrot.lane.b32.xlu0 %v849, 80
  %v1006 = vpop.permute.xlu0 %1005
  %v1008 = vsel %vm217, %v1004, 0
  %v1011 = vsel %vm217, %v1006, 0
  %1013 = vmatpush.bf16.xpose.msra.mxu0 0
  %1014 = vmatpush.bf16.xpose.msra.mxu0 0
  %1015 = vmatpush.bf16.xpose.msra.mxu0 0
  %1016 = vmatpush.bf16.xpose.msra.mxu0 0
  %1017 = vmatpush.bf16.xpose.msra.mxu0 0
  %1018 = vmatpush.bf16.xpose.msra.mxu0 0
  %1019 = vmatpush.bf16.xpose.msra.mxu0 0
  %1020 = vmatpush.bf16.xpose.msra.mxu0 %v1011
  %1021 = vmatmul.bf16.gmra.mxu0 %v1008
  %v1022 = vpop.f32.mrf.mxu0
  %v1023 = vadd.f32 0.0, %v1022
  %v1024 = vpop.f32.mrf.mxu0
  %v1025 = vadd.f32 0.0, %v1024
  %1026 = vdwg.mxu0
  %v1027 = vmul.f32 %v1023, 0.35355338
  %v1028 = vmul.f32 %v1025, 0.35355338
  %v1029 = vadd.f32 %v1027, %v171
  %v1030 = vadd.f32 %v1028, %v172
  %v1031 = vsel %vm76, %v1029, -inf
  %1032 = vmax.xlane.f32.xlu0 %v1031
  %v1033 = vpop.xlane.xlu0 %1032
  %v1034 = vsel %vm76, %v1030, -inf
  %1035 = vmax.xlane.f32.xlu0 %v1034
  %v1036 = vpop.xlane.xlu0 %1035
  %v1037 = vsub.f32 %v1029, %v1033
  %v1038 = vsub.f32 %v1030, %v1036
  %v1039 = vmul.f32 %v1037, 1.442695
  %v1040 = vpow.pop %v1039
  %v1041 = vmul.f32 %v1038, 1.442695
  %v1042 = vpow.pop %v1041
  %v1043 = vsel %vm76, %v1040, 0.0
  %1044 = vadd.xlane.f32.xlu0 %v1043
  %v1045 = vpop.xlane.xlu0 %1044
  %v1046 = vsel %vm76, %v1042, 0.0
  %1047 = vadd.xlane.f32.xlu0 %v1046
  %v1048 = vpop.xlane.xlu0 %1047
  %v1049 = vrcp.pop %v1045
  %v1050 = vrcp.pop %v1048
  %v1051 = vmul.f32 %v1040, %v1049
  %v1052 = vmul.f32 %v1042, %v1050
  %v1053 = vpack.c.bf16 %v1052, %v1051
  %1054 = vrot.lane.b32.xlu0 %v849, 48
  %v1055 = vpop.permute.xlu0 %1054
  %v1058 = vsel %vm76, %v1053, 0
  %1060 = vmatpush.bf16.msra.mxu0 0
  %1061 = vmatpush.bf16.msra.mxu0 0
  %1062 = vmatpush.bf16.msra.mxu0 0
  %1063 = vmatpush.bf16.msra.mxu0 0
  %1064 = vmatpush.bf16.msra.mxu0 0
  %1065 = vmatpush.bf16.msra.mxu0 0
  %1066 = vmatpush.bf16.msra.mxu0 0
  %1067 = vmatpush.bf16.msra.mxu0 %v1055
  %1068 = vmatmul.bf16.gmra.mxu0 %v1058
  %v1069 = vpop.f32.mrf.mxu0
  %v1070 = vadd.f32 0.0, %v1069
  %v1071 = vpop.f32.mrf.mxu0
  %v1072 = vadd.f32 0.0, %v1071
  %1073 = vdwg.mxu0
  %1076 = vrot.lane.b32.xlu0 %v1070, 16
  %v1077 = vpop.permute.xlu0 %1076
  %1078 = vrot.lane.b32.xlu0 %v1072, 16
  %v1079 = vpop.permute.xlu0 %1078
  %1082 = vst.msk [vmem:[#allocation3] sm:$0xff] %vm448, %v1077
  %1083 = vst.msk [vmem:[#allocation3 + $0x8] sm:$0xff] %vm448, %v1079
  %1084 = vrot.lane.b32.xlu0 %v849, 104
  %v1085 = vpop.permute.xlu0 %1084
  %1086 = vrot.lane.b32.xlu0 %v849, 72
  %v1087 = vpop.permute.xlu0 %1086
  %v1089 = vsel %vm217, %v1085, 0
  %v1092 = vsel %vm217, %v1087, 0
  %1094 = vmatpush.bf16.xpose.msra.mxu0 0
  %1095 = vmatpush.bf16.xpose.msra.mxu0 0
  %1096 = vmatpush.bf16.xpose.msra.mxu0 0
  %1097 = vmatpush.bf16.xpose.msra.mxu0 0
  %1098 = vmatpush.bf16.xpose.msra.mxu0 0
  %1099 = vmatpush.bf16.xpose.msra.mxu0 0
  %1100 = vmatpush.bf16.xpose.msra.mxu0 0
  %1101 = vmatpush.bf16.xpose.msra.mxu0 %v1092
  %1102 = vmatmul.bf16.gmra.mxu0 %v1089
  %v1103 = vpop.f32.mrf.mxu0
  %v1104 = vadd.f32 0.0, %v1103
  %v1105 = vpop.f32.mrf.mxu0
  %v1106 = vadd.f32 0.0, %v1105
  %1107 = vdwg.mxu0
  %v1108 = vmul.f32 %v1104, 0.35355338
  %v1109 = vmul.f32 %v1106, 0.35355338
  %v1110 = vadd.f32 %v1108, %v171
  %v1111 = vadd.f32 %v1109, %v172
  %v1112 = vsel %vm76, %v1110, -inf
  %1113 = vmax.xlane.f32.xlu0 %v1112
  %v1114 = vpop.xlane.xlu0 %1113
  %v1115 = vsel %vm76, %v1111, -inf
  %1116 = vmax.xlane.f32.xlu0 %v1115
  %v1117 = vpop.xlane.xlu0 %1116
  %v1118 = vsub.f32 %v1110, %v1114
  %v1119 = vsub.f32 %v1111, %v1117
  %v1120 = vmul.f32 %v1118, 1.442695
  %v1121 = vpow.pop %v1120
  %v1122 = vmul.f32 %v1119, 1.442695
  %v1123 = vpow.pop %v1122
  %v1124 = vsel %vm76, %v1121, 0.0
  %1125 = vadd.xlane.f32.xlu0 %v1124
  %v1126 = vpop.xlane.xlu0 %1125
  %v1127 = vsel %vm76, %v1123, 0.0
  %1128 = vadd.xlane.f32.xlu0 %v1127
  %v1129 = vpop.xlane.xlu0 %1128
  %v1130 = vrcp.pop %v1126
  %v1131 = vrcp.pop %v1129
  %v1132 = vmul.f32 %v1121, %v1130
  %v1133 = vmul.f32 %v1123, %v1131
  %v1134 = vpack.c.bf16 %v1133, %v1132
  %1135 = vrot.lane.b32.xlu0 %v849, 40
  %v1136 = vpop.permute.xlu0 %1135
  %v1139 = vsel %vm76, %v1134, 0
  %1141 = vmatpush.bf16.msra.mxu0 0
  %1142 = vmatpush.bf16.msra.mxu0 0
  %1143 = vmatpush.bf16.msra.mxu0 0
  %1144 = vmatpush.bf16.msra.mxu0 0
  %1145 = vmatpush.bf16.msra.mxu0 0
  %1146 = vmatpush.bf16.msra.mxu0 0
  %1147 = vmatpush.bf16.msra.mxu0 0
  %1148 = vmatpush.bf16.msra.mxu0 %v1136
  %1149 = vmatmul.bf16.gmra.mxu0 %v1139
  %v1150 = vpop.f32.mrf.mxu0
  %v1151 = vadd.f32 0.0, %v1150
  %v1152 = vpop.f32.mrf.mxu0
  %v1153 = vadd.f32 0.0, %v1152
  %1154 = vdwg.mxu0
  %1157 = vrot.lane.b32.xlu0 %v1151, 24
  %v1158 = vpop.permute.xlu0 %1157
  %1159 = vrot.lane.b32.xlu0 %v1153, 24
  %v1160 = vpop.permute.xlu0 %1159
  %1163 = vst.msk [vmem:[#allocation3] sm:$0xff] %vm530, %v1158
  %1164 = vst.msk [vmem:[#allocation3 + $0x8] sm:$0xff] %vm530, %v1160
  %v1165 = vld [vmem:[#allocation3] sm:$0xff]
  %v1166 = vld [vmem:[#allocation3 + $0x8] sm:$0xff]
  %v1167 = vld [vmem:[%s8] sm:$0xf]
  %v1168 = vld [vmem:[%s8 + $0x4] sm:$0xf]
  %v1169 = vld [vmem:[%s8 + $0x8] sm:$0xf]
  %v1170 = vld [vmem:[%s8 + $0xc] sm:$0xf]
  %v1171 = vpack.c.bf16 %v1166, %v1165
  %v1172 = vld [vmem:[%s9] sm:$0x1]
  %v1174 = vperm.slane %v1172, 0
  %v1180 = vunpack.c.l.b16 %v1167
  %v1181 = vunpack.c.l.b16 %v1168
  %v1182 = vunpack.c.l.b16 %v1169
  %v1183 = vunpack.c.l.b16 %v1170
  %v1184 = vpack.c.b16 %v1181, %v1180
  %v1185 = vpack.c.b16 %v1183, %v1182
  %v1189 = vsel %vm168, %v1171, 0
  %1191 = vmatpush.bf16.msra.mxu0 0
  %1192 = vmatpush.bf16.msra.mxu0 0
  %1193 = vmatpush.bf16.msra.mxu0 0
  %1194 = vmatpush.bf16.msra.mxu0 0
  %1195 = vmatpush.bf16.msra.mxu0 0
  %1196 = vmatpush.bf16.msra.mxu0 0
  %1197 = vmatpush.bf16.msra.mxu0 %v1185
  %1198 = vmatpush.bf16.msra.mxu0 %v1184
  %1199 = vmatmul.bf16.gmra.mxu0 %v1189
  %v1200 = vpop.f32.mrf.mxu0
  %v1201 = vadd.f32 %v1174, %v1200
  %v1202 = vpop.f32.mrf.mxu0
  %v1203 = vadd.f32 %v1174, %v1202
  %1204 = vdwg.mxu0
  %v1205 = vadd.f32 %v809, %v1201
  %v1206 = vadd.f32 %v810, %v1203
  %v1207 = vld [vmem:[%s10] sm:$0x1]
  %v1208 = vld [vmem:[%s11] sm:$0x1]
  %v1209 = vsel %vm168, %v1205, 0.0
  %1210 = vadd.xlane.f32.xlu0 %v1209
  %v1211 = vpop.xlane.xlu0 %1210
  %v1212 = vsel %vm168, %v1206, 0.0
  %1213 = vadd.xlane.f32.xlu0 %v1212
  %v1214 = vpop.xlane.xlu0 %1213
  %v1215 = vmul.f32 %v1211, %v589
  %v1216 = vmul.f32 %v1214, %v589
  %v1217 = vsub.f32 %v1205, %v1215
  %v1218 = vsub.f32 %v1206, %v1216
  %v1219 = vmul.f32 %v1217, %v1217
  %v1220 = vmul.f32 %v1218, %v1218
  %v1221 = vsel %vm168, %v1219, 0.0
  %1222 = vadd.xlane.f32.xlu0 %v1221
  %v1223 = vpop.xlane.xlu0 %1222
  %v1224 = vsel %vm168, %v1220, 0.0
  %1225 = vadd.xlane.f32.xlu0 %v1224
  %v1226 = vpop.xlane.xlu0 %1225
  %v1227 = vmul.f32 %v1223, %v589
  %v1228 = vmul.f32 %v1226, %v589
  %v1229 = vadd.f32 %v1227, 1e-12
  %v1230 = vadd.f32 %v1228, 1e-12
  %v1231 = vrsqrt.pop %v1229
  %v1232 = vmul.f32 %v1231, %v1229
  %v1233 = vmul.f32 %v1232, %v1231
  %v1234 = vmul.f32 0.5, %v1233
  %v1235 = vsub.f32 1.5, %v1234
  %v1236 = vmul.f32 %v1231, %v1235
  %vm1237 = vweird.f32 %v1229
  %vm1238 = vweird.f32 %v1231
  %vm1239 = vmor %vm1237, %vm1238
  %v1240 = vsel %vm1239, %v1231, %v1236
  %v1241 = vrsqrt.pop %v1230
  %v1242 = vmul.f32 %v1241, %v1230
  %v1243 = vmul.f32 %v1242, %v1241
  %v1244 = vmul.f32 0.5, %v1243
  %v1245 = vsub.f32 1.5, %v1244
  %v1246 = vmul.f32 %v1241, %v1245
  %vm1247 = vweird.f32 %v1230
  %vm1248 = vweird.f32 %v1241
  %vm1249 = vmor %vm1247, %vm1248
  %v1250 = vsel %vm1249, %v1241, %v1246
  %v1251 = vmul.f32 %v1217, %v1240
  %v1252 = vmul.f32 %v1218, %v1250
  %v1254 = vperm.slane %v1207, 0
  %v1256 = vmul.f32 %v1251, %v1254
  %v1257 = vmul.f32 %v1252, %v1254
  %v1259 = vperm.slane %v1208, 0
  %v1261 = vadd.f32 %v1256, %v1259
  %v1262 = vadd.f32 %v1257, %v1259
  %v1263 = vld [vmem:[%s12] sm:$0xf]
  %v1264 = vld [vmem:[%s12 + $0x4] sm:$0xf]
  %v1265 = vld [vmem:[%s12 + $0x8] sm:$0xf]
  %v1266 = vld [vmem:[%s12 + $0xc] sm:$0xf]
  %v1267 = vpack.c.bf16 %v1262, %v1261
  %v1268 = vld [vmem:[%s13] sm:$0x1]
  %v1270 = vperm.slane %v1268, 0
  %v1276 = vunpack.c.l.b16 %v1263
  %v1277 = vunpack.c.l.b16 %v1264
  %v1278 = vunpack.c.l.b16 %v1265
  %v1279 = vunpack.c.l.b16 %v1266
  %v1280 = vpack.c.b16 %v1277, %v1276
  %v1281 = vpack.c.b16 %v1279, %v1278
  %v1285 = vsel %vm168, %v1267, 0
  %1287 = vmatpush.bf16.msra.mxu0 0
  %1288 = vmatpush.bf16.msra.mxu0 0
  %1289 = vmatpush.bf16.msra.mxu0 0
  %1290 = vmatpush.bf16.msra.mxu0 0
  %1291 = vmatpush.bf16.msra.mxu0 0
  %1292 = vmatpush.bf16.msra.mxu0 0
  %1293 = vmatpush.bf16.msra.mxu0 %v1281
  %1294 = vmatpush.bf16.msra.mxu0 %v1280
  %1295 = vmatmul.bf16.gmra.mxu0 %v1285
  %v1296 = vpop.f32.mrf.mxu0
  %v1297 = vadd.f32 %v1270, %v1296
  %v1298 = vpop.f32.mrf.mxu0
  %v1299 = vadd.f32 %v1270, %v1298
  %1300 = vdwg.mxu0
  %v1301 = vmul.f32 %v1297, %v1297
  %v1302 = vmul.f32 %v1299, %v1299
  %v1303 = vmul.f32 %v1297, %v1301
  %v1304 = vmul.f32 %v1299, %v1302
  %v1305 = vmul.f32 %v1303, 0.044715
  %v1306 = vmul.f32 %v1304, 0.044715
  %v1307 = vadd.f32 %v1297, %v1305
  %v1308 = vadd.f32 %v1299, %v1306
  %v1309 = vmul.f32 %v1307, 0.7978846
  %v1310 = vmul.f32 %v1308, 0.7978846
  %v1311 = vtanh.pop %v1309
  %v1312 = vtanh.pop %v1310
  %v1313 = vadd.f32 %v1311, 1.0
  %v1314 = vadd.f32 %v1312, 1.0
  %v1315 = vmul.f32 %v1313, 0.5
  %v1316 = vmul.f32 %v1314, 0.5
  %v1317 = vmul.f32 %v1297, %v1315
  %v1318 = vmul.f32 %v1299, %v1316
  %v1319 = vld [vmem:[%s14] sm:$0xf]
  %v1320 = vld [vmem:[%s14 + $0x4] sm:$0xf]
  %v1321 = vld [vmem:[%s14 + $0x8] sm:$0xf]
  %v1322 = vld [vmem:[%s14 + $0xc] sm:$0xf]
  %v1323 = vld [vmem:[%s14 + $0x10] sm:$0xf]
  %v1324 = vld [vmem:[%s14 + $0x14] sm:$0xf]
  %v1325 = vld [vmem:[%s14 + $0x18] sm:$0xf]
  %v1326 = vld [vmem:[%s14 + $0x1c] sm:$0xf]
  %v1327 = vpack.c.bf16 %v1318, %v1317
  %v1328 = vld [vmem:[%s15] sm:$0x1]
  %v1330 = vperm.slane %v1328, 0
  %v1340 = vunpack.c.l.b16 %v1319
  %v1341 = vunpack.c.l.b16 %v1320
  %v1342 = vunpack.c.l.b16 %v1321
  %v1343 = vunpack.c.l.b16 %v1322
  %v1344 = vunpack.c.l.b16 %v1323
  %v1345 = vunpack.c.l.b16 %v1324
  %v1346 = vunpack.c.l.b16 %v1325
  %v1347 = vunpack.c.l.b16 %v1326
  %v1348 = vpack.c.b16 %v1341, %v1340
  %v1349 = vpack.c.b16 %v1343, %v1342
  %v1350 = vpack.c.b16 %v1345, %v1344
  %v1351 = vpack.c.b16 %v1347, %v1346
  %v1357 = vsel %vm731, %v1327, 0
  %1359 = vmatpush.bf16.msra.mxu0 0
  %1360 = vmatpush.bf16.msra.mxu0 0
  %1361 = vmatpush.bf16.msra.mxu0 0
  %1362 = vmatpush.bf16.msra.mxu0 0
  %1363 = vmatpush.bf16.msra.mxu0 %v1351
  %1364 = vmatpush.bf16.msra.mxu0 %v1350
  %1365 = vmatpush.bf16.msra.mxu0 %v1349
  %1366 = vmatpush.bf16.msra.mxu0 %v1348
  %1367 = vmatmul.bf16.gmra.mxu0 %v1357
  %v1368 = vpop.f32.mrf.mxu0
  %v1369 = vadd.f32 %v1330, %v1368
  %v1370 = vpop.f32.mrf.mxu0
  %v1371 = vadd.f32 %v1330, %v1370
  %1372 = vdwg.mxu0
  %v1373 = vadd.f32 %v1261, %v1369
  %v1374 = vadd.f32 %v1262, %v1371
  %v1375 = vld [vmem:[%s16] sm:$0x1]
  %v1376 = vld [vmem:[%s17] sm:$0x1]
  %v1377 = vsel %vm168, %v1373, 0.0
  %1378 = vadd.xlane.f32.xlu0 %v1377
  %v1379 = vpop.xlane.xlu0 %1378
  %v1380 = vsel %vm168, %v1374, 0.0
  %1381 = vadd.xlane.f32.xlu0 %v1380
  %v1382 = vpop.xlane.xlu0 %1381
  %v1383 = vmul.f32 %v1379, %v589
  %v1384 = vmul.f32 %v1382, %v589
  %v1385 = vsub.f32 %v1373, %v1383
  %v1386 = vsub.f32 %v1374, %v1384
  %v1387 = vmul.f32 %v1385, %v1385
  %v1388 = vmul.f32 %v1386, %v1386
  %v1389 = vsel %vm168, %v1387, 0.0
  %1390 = vadd.xlane.f32.xlu0 %v1389
  %v1391 = vpop.xlane.xlu0 %1390
  %v1392 = vsel %vm168, %v1388, 0.0
  %1393 = vadd.xlane.f32.xlu0 %v1392
  %v1394 = vpop.xlane.xlu0 %1393
  %v1395 = vmul.f32 %v1391, %v589
  %v1396 = vmul.f32 %v1394, %v589
  %v1397 = vadd.f32 %v1395, 1e-12
  %v1398 = vadd.f32 %v1396, 1e-12
  %v1399 = vrsqrt.pop %v1397
  %v1400 = vmul.f32 %v1399, %v1397
  %v1401 = vmul.f32 %v1400, %v1399
  %v1402 = vmul.f32 0.5, %v1401
  %v1403 = vsub.f32 1.5, %v1402
  %v1404 = vmul.f32 %v1399, %v1403
  %vm1405 = vweird.f32 %v1397
  %vm1406 = vweird.f32 %v1399
  %vm1407 = vmor %vm1405, %vm1406
  %v1408 = vsel %vm1407, %v1399, %v1404
  %v1409 = vrsqrt.pop %v1398
  %v1410 = vmul.f32 %v1409, %v1398
  %v1411 = vmul.f32 %v1410, %v1409
  %v1412 = vmul.f32 0.5, %v1411
  %v1413 = vsub.f32 1.5, %v1412
  %v1414 = vmul.f32 %v1409, %v1413
  %vm1415 = vweird.f32 %v1398
  %vm1416 = vweird.f32 %v1409
  %vm1417 = vmor %vm1415, %vm1416
  %v1418 = vsel %vm1417, %v1409, %v1414
  %v1419 = vmul.f32 %v1385, %v1408
  %v1420 = vmul.f32 %v1386, %v1418
  %v1422 = vperm.slane %v1375, 0
  %v1424 = vmul.f32 %v1419, %v1422
  %v1425 = vmul.f32 %v1420, %v1422
  %v1427 = vperm.slane %v1376, 0
  %v1429 = vadd.f32 %v1424, %v1427
  %v1430 = vadd.f32 %v1425, %v1427
  %1431 = vst.msk [vmem:[#allocation2] sm:$0xff] %vm168, %v1429
  %1432 = vst.msk [vmem:[#allocation2 + $0x8] sm:$0xff] %vm168, %v1430
  %v1433 = vld [vmem:[#allocation2] sm:$0xff]
  %v1434 = vld [vmem:[#allocation2 + $0x8] sm:$0xff]
  %v1435 = vld [vmem:[%s18] sm:$0xf]
  %v1436 = vld [vmem:[%s18 + $0x4] sm:$0xf]
  %v1437 = vld [vmem:[%s18 + $0x8] sm:$0xf]
  %v1438 = vld [vmem:[%s18 + $0xc] sm:$0xf]
  %v1439 = vpack.c.bf16 %v1434, %v1433
  %v1440 = vld [vmem:[%s19] sm:$0x1]
  %v1442 = vperm.slane %v1440, 0
  %v1448 = vunpack.c.l.b16 %v1435
  %v1449 = vunpack.c.l.b16 %v1436
  %v1450 = vunpack.c.l.b16 %v1437
  %v1451 = vunpack.c.l.b16 %v1438
  %v1452 = vpack.c.b16 %v1449, %v1448
  %v1453 = vpack.c.b16 %v1451, %v1450
  %v1457 = vsel %vm168, %v1439, 0
  %1459 = vmatpush.bf16.msra.mxu0 0
  %1460 = vmatpush.bf16.msra.mxu0 0
  %1461 = vmatpush.bf16.msra.mxu0 0
  %1462 = vmatpush.bf16.msra.mxu0 0
  %1463 = vmatpush.bf16.msra.mxu0 0
  %1464 = vmatpush.bf16.msra.mxu0 0
  %1465 = vmatpush.bf16.msra.mxu0 %v1453
  %1466 = vmatpush.bf16.msra.mxu0 %v1452
  %1467 = vmatmul.bf16.gmra.mxu0 %v1457
  %v1468 = vpop.f32.mrf.mxu0
  %v1469 = vadd.f32 %v1442, %v1468
  %v1470 = vpop.f32.mrf.mxu0
  %v1471 = vadd.f32 %v1442, %v1470
  %1472 = vdwg.mxu0
  %v1473 = vtanh.pop %v1469
  %v1474 = vtanh.pop %v1471
  %v1475 = vld [vmem:[%s20] sm:$0xf]
  %v1476 = vld [vmem:[%s20 + $0x4] sm:$0xf]
  %v1477 = vld [vmem:[%s20 + $0x8] sm:$0xf]
  %v1478 = vld [vmem:[%s20 + $0xc] sm:$0xf]
  %v1479 = vpack.c.bf16 %v1474, %v1473
  %v1480 = vld [vmem:[%s21] sm:$0x1]
  %v1482 = vperm.slane %v1480, 0
  %v1488 = vunpack.c.l.b16 %v1475
  %v1489 = vunpack.c.l.b16 %v1476
  %v1490 = vunpack.c.l.b16 %v1477
  %v1491 = vunpack.c.l.b16 %v1478
  %v1492 = vpack.c.b16 %v1489, %v1488
  %v1493 = vpack.c.b16 %v1491, %v1490
  %v1497 = vsel %vm168, %v1479, 0
  %1499 = vmatpush.bf16.msra.mxu0 0
  %1500 = vmatpush.bf16.msra.mxu0 0
  %1501 = vmatpush.bf16.msra.mxu0 0
  %1502 = vmatpush.bf16.msra.mxu0 0
  %1503 = vmatpush.bf16.msra.mxu0 0
  %1504 = vmatpush.bf16.msra.mxu0 0
  %1505 = vmatpush.bf16.msra.mxu0 %v1493
  %1506 = vmatpush.bf16.msra.mxu0 %v1492
  %1507 = vmatmul.bf16.gmra.mxu0 %v1497
  %v1508 = vpop.f32.mrf.mxu0
  %v1509 = vadd.f32 %v1482, %v1508
  %v1510 = vpop.f32.mrf.mxu0
  %v1511 = vadd.f32 %v1482, %v1510
  %1512 = vdwg.mxu0
  %1513 = vst [vmem:[%s22] sm:$0xff] %v1509
  %1514 = vst [vmem:[%s22 + $0x8] sm:$0xff] %v1511
  // Predicated region
  $region90: #{news_subject_classifier_forward.1} parent=0 // pred_check
    _
  $region91: #{news_subject_classifier_forward.1} parent=0 // pred_check_branch
    %1516 = sbr.rel (0) target = $region93
  $region92: #{news_subject_classifier_forward.1} parent=0 // pred_region
    _
  $region93: #{news_subject_classifier_forward.1} parent=0 // pred_fallthru
    _
  // Predicated region
  $region94: #{news_subject_classifier_forward.1} parent=0 // pred_check
    _
  $region95: #{news_subject_classifier_forward.1} parent=0 // pred_check_branch
    %1518 = sbr.rel (0) target = $region97
  $region96: #{news_subject_classifier_forward.1} parent=0 // pred_region
    _
  $region97: #{news_subject_classifier_forward.1} parent=0 // pred_fallthru
    _

</llo_original>
